<compile_context>
chip_gen: v7x
topology: tpu7x:2x2x1
jax: 0.10.0
libtpu: 0.0.40
codegen_flags: <defaults>
</compile_context>

<pallas_src>
import jax
import jax.numpy as jnp
from jax.experimental import pallas as pl
from jax.experimental.pallas import tpu as pltpu


def _round_up(a, b):
    return ((a + b - 1) // b) * b


def _make_node_model_kernel(n_layers, tile_n, dh):
    """n_layers = total number of Linear layers in the MLP (= n_hidden + 1)."""

    def kernel(dest_ref, xf_ref, ea_ref, *refs):
        # refs = [w0xf, w0a, b0, w1, b1, ..., w_{L-1}, b_{L-1}, out_ref, acc_ref]
        acc_ref = refs[-1]
        out_ref = refs[-2]
        wrefs = refs[:-2]

        e = pl.program_id(1)

        # ---- init accumulator at the start of the E reduction ---------------
        @pl.when(e == 0)
        def _():
            acc_ref[...] = jnp.zeros_like(acc_ref)

        # ---- scatter-sum of [edge_attr | 1] into this node tile (MXU) -------
        dest = dest_ref[...]                                   # [1, TILE_E] int32
        tile_e = dest.shape[1]
        rows = (pl.program_id(0) * tile_n
                + jax.lax.broadcasted_iota(jnp.int32, (tile_n, tile_e), 0))
        mask = (rows == dest).astype(jnp.float32)              # exact 0/1 one-hot
        acc_ref[...] += jnp.dot(mask, ea_ref[...],
                                preferred_element_type=jnp.float32)

        # ---- last E step: finish scatter_mean and run the MLP once ----------
        @pl.when(e == pl.num_programs(1) - 1)
        def _():
            seg = acc_ref[...]                                 # [TILE_N, Dh+1]
            counts = seg[:, dh:dh + 1]                         # [TILE_N, 1]
            agg = seg[:, :dh] / jnp.maximum(counts, 1.0)       # empty segs -> 0

            # layer 0: concat([x, agg, f]) @ W0 + b0, concat-free (2 MXU calls)
            w0xf, w0a, b0 = wrefs[0], wrefs[1], wrefs[2]
            h = (jnp.dot(xf_ref[...], w0xf[...],
                         preferred_element_type=jnp.float32)
                 + jnp.dot(agg, w0a[...],
                           preferred_element_type=jnp.float32)
                 + b0[...])

            # remaining linears, SiLU after every linear except the last
            for k in range(1, n_layers):
                h = h * jax.nn.sigmoid(h)
                w = wrefs[3 + 2 * (k - 1)]
                b = wrefs[3 + 2 * (k - 1) + 1]
                h = jnp.dot(h, w[...], preferred_element_type=jnp.float32) + b[...]

            out_ref[...] = h.astype(out_ref.dtype)

    return kernel


def node_model_forward(x, edge_index, edge_attr, f, params,
                       *, tile_n=256, tile_e=1024):
    """Pallas implementation of NodeModel.forward(x, edge_index, edge_attr, f).

    tile_n / tile_e defaults are sized for the 16-32 MiB default scoped VMEM on
    v5e/v6e/v7x; if larger than necessary they are clamped to the padded
    problem size.  tile_e must be a multiple of 128 when multiple E tiles are
    needed (the default is).
    """
    N, dh = x.shape
    E = edge_attr.shape[0]
    dfg = f.shape[1]

    # ---- clamp tiles and pad N / E to tile multiples (cheap XLA-side ops) ----
    tile_n = min(tile_n, _round_up(N, 8))
    tile_e = min(tile_e, _round_up(E, 8))
    n_pad = _round_up(N, tile_n)
    e_pad = _round_up(E, tile_e)

    # [x | f] pre-concatenated so layer 0 needs two MXU calls instead of three.
    xf = jnp.concatenate([x, f], axis=1)
    xf = jnp.pad(xf, ((0, n_pad - N), (0, 0)))

    # [edge_attr | 1]: counts come out of the same one-hot matmul as the sums.
    ea_aug = jnp.concatenate(
        [edge_attr, jnp.ones((E, 1), edge_attr.dtype)], axis=1)
    ea_aug = jnp.pad(ea_aug, ((0, e_pad - E), (0, 0)))

    dest = edge_index[1].astype(jnp.int32)
    dest = jnp.pad(dest, (0, e_pad - E), constant_values=-1).reshape(1, e_pad)

    # ---- layer-0 weight split: [x|f] block and agg block ---------------------
    w0, b0 = params[0]
    w0x = w0[:dh, :]
    w0a = w0[dh:2 * dh, :]
    w0f = w0[2 * dh:2 * dh + dfg, :]
    w0xf = jnp.concatenate([w0x, w0f], axis=0)                  # [dh+dfg, dh]

    flat_wb = [w0xf, w0a, b0.reshape(1, -1)]
    for (w, b) in params[1:]:
        flat_wb += [w, b.reshape(1, -1)]

    n_layers = len(params)
    kernel = _make_node_model_kernel(n_layers, tile_n, dh)

    grid = (n_pad // tile_n, e_pad // tile_e)

    # Weights / biases: constant block index -> DMA'd once, VMEM-resident.
    def _const_spec(arr):
        return pl.BlockSpec(arr.shape, lambda i, e: (0, 0))

    in_specs = [
        pl.BlockSpec((1, tile_e), lambda i, e: (0, e)),          # dest
        pl.BlockSpec((tile_n, dh + dfg), lambda i, e: (i, 0)),   # [x | f]
        pl.BlockSpec((tile_e, dh + 1), lambda i, e: (e, 0)),     # [edge_attr | 1]
    ] + [_const_spec(a) for a in flat_wb]

    out_specs = pl.BlockSpec((tile_n, dh), lambda i, e: (i, 0))

    # Advisory cost hint for XLA scheduling around the custom call.
    scatter_flops = 2 * n_pad * e_pad * (dh + 1)
    mlp_flops = 2 * n_pad * (dh + dfg) * dh + 2 * n_pad * dh * dh * n_layers
    bytes_accessed = 4 * int(xf.size + ea_aug.size + dest.size + n_pad * dh
                             + sum(a.size for a in flat_wb))
    cost = pl.CostEstimate(flops=int(scatter_flops + mlp_flops),
                           transcendentals=int(n_pad * dh * (n_layers - 1)),
                           bytes_accessed=bytes_accessed)

    out = pl.pallas_call(
        kernel,
        out_shape=jax.ShapeDtypeStruct((n_pad, dh), jnp.float32),
        grid_spec=pltpu.PrefetchScalarGridSpec(
            num_scalar_prefetch=0,
            grid=grid,
            in_specs=in_specs,
            out_specs=out_specs,
            scratch_shapes=[pltpu.VMEM((tile_n, dh + 1), jnp.float32)],
        ),
        compiler_params=pltpu.CompilerParams(
            dimension_semantics=("parallel", "arbitrary"),
            vmem_limit_bytes=32 * 1024 * 1024,
        ),
        cost_estimate=cost,
    )(dest, xf, ea_aug, *flat_wb)

    return out[:N]


def _reference_forward(x, edge_index, edge_attr, f, params):
    """Plain-JAX reference mirroring the PyTorch module."""
    N = x.shape[0]
    dest = edge_index[1]
    seg_sum = jax.ops.segment_sum(edge_attr, dest, num_segments=N)
    counts = jax.ops.segment_sum(jnp.ones((edge_attr.shape[0],)), dest,
                                 num_segments=N)
    agg = seg_sum / jnp.maximum(counts, 1.0)[:, None]
    h = jnp.concatenate([x, agg, f], axis=1)
    for i, (w, b) in enumerate(params):
        h = h @ w + b
        if i != len(params) - 1:
            h = h * jax.nn.sigmoid(h)
    return h


def init_params(key, n_hidden, dim_hidden, dims_f, dims_g):
    """Linear params matching MLP([2*Dh + Df + Dg] + n_hidden*[Dh] + [Dh])."""
    layer_vec = [2 * dim_hidden + dims_f + dims_g] + n_hidden * [dim_hidden] + [dim_hidden]
    params = []
    for k in range(len(layer_vec) - 1):
        key, k1, k2 = jax.random.split(key, 3)
        fan_in = layer_vec[k]
        scale = 1.0 / jnp.sqrt(fan_in)
        w = jax.random.uniform(k1, (layer_vec[k], layer_vec[k + 1]),
                               minval=-scale, maxval=scale, dtype=jnp.float32)
        b = jax.random.uniform(k2, (layer_vec[k + 1],),
                               minval=-scale, maxval=scale, dtype=jnp.float32)
        params.append((w, b))
    return params


if __name__ == "__main__":
    # Small synthetic problem consistent with the module's forward.
    n_hidden = 2
    dim_hidden = 32
    dims = {"f": 4, "g": 2}
    N = 200   # nodes
    E = 600   # edges

    key = jax.random.PRNGKey(0)
    key, kx, ke, kf, ki, kp = jax.random.split(key, 6)

    x = jax.random.normal(kx, (N, dim_hidden), dtype=jnp.float32)
    edge_attr = jax.random.normal(ke, (E, dim_hidden), dtype=jnp.float32)
    f = jax.random.normal(kf, (N, dims["f"] + dims["g"]), dtype=jnp.float32)
    edge_index = jax.random.randint(ki, (2, E), 0, N, dtype=jnp.int32)

    params = init_params(kp, n_hidden, dim_hidden, dims["f"], dims["g"])

    # Small tiles here purely to exercise the (N-tiles x E-tiles) grid,
    # accumulator init/finalize and padding paths; production defaults are
    # tile_n=256, tile_e=1024.
    out = node_model_forward(x, edge_index, edge_attr, f, params,
                             tile_n=64, tile_e=128)
    out = jax.block_until_ready(out)

    ref = _reference_forward(x, edge_index, edge_attr, f, params)
    assert out.shape == (N, dim_hidden)
    assert jnp.allclose(out, ref, atol=1e-4, rtol=1e-4), "mismatch vs reference"

    print("KERNEL_OK")
</pallas_src>

<mosaic_0001>
module attributes {stable_mosaic.version = 11 : i64} {
  func.func @kernel(%arg0: i32, %arg1: i32, %arg2: memref<1x128xi32, #tpu.memory_space<vmem>>, %arg3: memref<64x38xf32, #tpu.memory_space<vmem>>, %arg4: memref<128x33xf32, #tpu.memory_space<vmem>>, %arg5: memref<38x32xf32, #tpu.memory_space<vmem>>, %arg6: memref<32x32xf32, #tpu.memory_space<vmem>>, %arg7: memref<1x32xf32, #tpu.memory_space<vmem>>, %arg8: memref<32x32xf32, #tpu.memory_space<vmem>>, %arg9: memref<1x32xf32, #tpu.memory_space<vmem>>, %arg10: memref<32x32xf32, #tpu.memory_space<vmem>>, %arg11: memref<1x32xf32, #tpu.memory_space<vmem>>, %arg12: memref<64x32xf32, #tpu.memory_space<vmem>>, %arg13: memref<64x33xf32, #tpu.memory_space<vmem>>) attributes {dimension_semantics = [#tpu.dimension_semantics<parallel>, #tpu.dimension_semantics<arbitrary>], iteration_bounds = array<i64: 4, 5>, scalar_prefetch = 0 : i64, scratch_operands = 1 : i64, tpu.core_type = #tpu.core_type<tc>, window_params = [{transform_indices = @transform_0, window_bounds = array<i64: 1, 128>}, {transform_indices = @transform_1, window_bounds = array<i64: 64, 38>}, {transform_indices = @transform_2, window_bounds = array<i64: 128, 33>}, {pipeline_mode = #tpu.pipeline_mode<synchronous>, transform_indices = @transform_3, window_bounds = array<i64: 38, 32>}, {pipeline_mode = #tpu.pipeline_mode<synchronous>, transform_indices = @transform_4, window_bounds = array<i64: 32, 32>}, {pipeline_mode = #tpu.pipeline_mode<synchronous>, transform_indices = @transform_5, window_bounds = array<i64: 1, 32>}, {pipeline_mode = #tpu.pipeline_mode<synchronous>, transform_indices = @transform_6, window_bounds = array<i64: 32, 32>}, {pipeline_mode = #tpu.pipeline_mode<synchronous>, transform_indices = @transform_7, window_bounds = array<i64: 1, 32>}, {pipeline_mode = #tpu.pipeline_mode<synchronous>, transform_indices = @transform_8, window_bounds = array<i64: 32, 32>}, {pipeline_mode = #tpu.pipeline_mode<synchronous>, transform_indices = @transform_9, window_bounds = array<i64: 1, 32>}, {transform_indices = @transform_10, window_bounds = array<i64: 64, 32>}]} {
    %c0_i32 = arith.constant 0 : i32
    %0 = arith.cmpi eq, %arg1, %c0_i32 : i32
    %1 = arith.extui %0 : i1 to i32
    %c0_i32_0 = arith.constant 0 : i32
    %2 = arith.cmpi ne, %1, %c0_i32_0 : i32
    scf.if %2 {
      %cst_9 = arith.constant 0.000000e+00 : f32
      %20 = vector.broadcast %cst_9 : f32 to vector<64x33xf32>
      %c0_10 = arith.constant 0 : index
      %c0_11 = arith.constant 0 : index
      %21 = vector.load %arg13[%c0_10, %c0_11] : memref<64x33xf32, #tpu.memory_space<vmem>>, vector<64x33xf32>
      tpu.vector_store %arg13[%c0_10, %c0_11], %20 {strides = array<i32>} : memref<64x33xf32, #tpu.memory_space<vmem>>, vector<64x33xf32>,
    } else {
    }
    %c0 = arith.constant 0 : index
    %c0_1 = arith.constant 0 : index
    %3 = vector.load %arg2[%c0, %c0_1] : memref<1x128xi32, #tpu.memory_space<vmem>>, vector<1x128xi32>
    %c64_i32 = arith.constant 64 : i32
    %4 = arith.muli %arg0, %c64_i32 : i32
    %5 = tpu.iota {dimensions = array<i32: 0>} : vector<64x128xi32>
    %6 = vector.broadcast %4 : i32 to vector<64x128xi32>
    %7 = arith.addi %6, %5 : vector<64x128xi32>
    %8 = vector.broadcast %3 : vector<1x128xi32> to vector<64x128xi32>
    %9 = arith.cmpi eq, %7, %8 : vector<64x128xi32>
    %10 = arith.extui %9 : vector<64x128xi1> to vector<64x128xi32>
    %11 = arith.sitofp %10 : vector<64x128xi32> to vector<64x128xf32>
    %c0_2 = arith.constant 0 : index
    %c0_3 = arith.constant 0 : index
    %12 = vector.load %arg13[%c0_2, %c0_3] : memref<64x33xf32, #tpu.memory_space<vmem>>, vector<64x33xf32>
    %c0_4 = arith.constant 0 : index
    %c0_5 = arith.constant 0 : index
    %13 = vector.load %arg4[%c0_4, %c0_5] : memref<128x33xf32, #tpu.memory_space<vmem>>, vector<128x33xf32>
    %cst = arith.constant dense<0.000000e+00> : vector<64x33xf32>
    %14 = tpu.matmul %11, %13, %cst {dimension_numbers = #tpu.dot_dimension_numbers<[1], [0], [0], [1], [0, 0, 1, 1], [], []>} : vector<64x128xf32>, vector<128x33xf32>, vector<64x33xf32> -> vector<64x33xf32>
    %15 = arith.addf %12, %14 : vector<64x33xf32>
    %c0_6 = arith.constant 0 : index
    %c0_7 = arith.constant 0 : index
    %16 = vector.load %arg13[%c0_6, %c0_7] : memref<64x33xf32, #tpu.memory_space<vmem>>, vector<64x33xf32>
    tpu.vector_store %arg13[%c0_6, %c0_7], %15 {strides = array<i32>} : memref<64x33xf32, #tpu.memory_space<vmem>>, vector<64x33xf32>,
    %c4_i32 = arith.constant 4 : i32
    %17 = arith.cmpi eq, %arg1, %c4_i32 : i32
    %18 = arith.extui %17 : i1 to i32
    %c0_i32_8 = arith.constant 0 : i32
    %19 = arith.cmpi ne, %18, %c0_i32_8 : i32
    scf.if %19 {
      %c0_9 = arith.constant 0 : index
      %c0_10 = arith.constant 0 : index
      %20 = vector.load %arg13[%c0_9, %c0_10] : memref<64x33xf32, #tpu.memory_space<vmem>>, vector<64x33xf32>
      %21 = vector.extract_strided_slice %20 {offsets = [0, 32], sizes = [64, 1], strides = [1, 1]} : vector<64x33xf32> to vector<64x1xf32>
      %22 = vector.extract_strided_slice %20 {offsets = [0, 0], sizes = [64, 32], strides = [1, 1]} : vector<64x33xf32> to vector<64x32xf32>
      %cst_11 = arith.constant 1.000000e+00 : f32
      %23 = vector.broadcast %cst_11 : f32 to vector<64x1xf32>
      %24 = arith.maximumf %21, %23 : vector<64x1xf32>
      %25 = vector.broadcast %24 : vector<64x1xf32> to vector<64x32xf32>
      %26 = arith.divf %22, %25 : vector<64x32xf32>
      %c0_12 = arith.constant 0 : index
      %c0_13 = arith.constant 0 : index
      %27 = vector.load %arg3[%c0_12, %c0_13] : memref<64x38xf32, #tpu.memory_space<vmem>>, vector<64x38xf32>
      %c0_14 = arith.constant 0 : index
      %c0_15 = arith.constant 0 : index
      %28 = vector.load %arg5[%c0_14, %c0_15] : memref<38x32xf32, #tpu.memory_space<vmem>>, vector<38x32xf32>
      %cst_16 = arith.constant dense<0.000000e+00> : vector<64x32xf32>
      %29 = tpu.matmul %27, %28, %cst_16 {dimension_numbers = #tpu.dot_dimension_numbers<[1], [0], [0], [1], [0, 0, 1, 1], [], []>} : vector<64x38xf32>, vector<38x32xf32>, vector<64x32xf32> -> vector<64x32xf32>
      %c0_17 = arith.constant 0 : index
      %c0_18 = arith.constant 0 : index
      %30 = vector.load %arg6[%c0_17, %c0_18] : memref<32x32xf32, #tpu.memory_space<vmem>>, vector<32x32xf32>
      %cst_19 = arith.constant dense<0.000000e+00> : vector<64x32xf32>
      %31 = tpu.matmul %26, %30, %cst_19 {dimension_numbers = #tpu.dot_dimension_numbers<[1], [0], [0], [1], [0, 0, 1, 1], [], []>} : vector<64x32xf32>, vector<32x32xf32>, vector<64x32xf32> -> vector<64x32xf32>
      %32 = arith.addf %29, %31 : vector<64x32xf32>
      %c0_20 = arith.constant 0 : index
      %c0_21 = arith.constant 0 : index
      %33 = vector.load %arg7[%c0_20, %c0_21] : memref<1x32xf32, #tpu.memory_space<vmem>>, vector<1x32xf32>
      %34 = vector.broadcast %33 : vector<1x32xf32> to vector<64x32xf32>
      %35 = arith.addf %32, %34 : vector<64x32xf32>
      %36 = arith.negf %35 : vector<64x32xf32>
      %37 = math.exp %36 : vector<64x32xf32>
      %cst_22 = arith.constant 1.000000e+00 : f32
      %38 = vector.broadcast %cst_22 : f32 to vector<64x32xf32>
      %39 = arith.addf %38, %37 : vector<64x32xf32>
      %40 = arith.divf %38, %39 : vector<64x32xf32>
      %41 = arith.mulf %35, %40 : vector<64x32xf32>
      %c0_23 = arith.constant 0 : index
      %c0_24 = arith.constant 0 : index
      %42 = vector.load %arg8[%c0_23, %c0_24] : memref<32x32xf32, #tpu.memory_space<vmem>>, vector<32x32xf32>
      %cst_25 = arith.constant dense<0.000000e+00> : vector<64x32xf32>
      %43 = tpu.matmul %41, %42, %cst_25 {dimension_numbers = #tpu.dot_dimension_numbers<[1], [0], [0], [1], [0, 0, 1, 1], [], []>} : vector<64x32xf32>, vector<32x32xf32>, vector<64x32xf32> -> vector<64x32xf32>
      %c0_26 = arith.constant 0 : index
      %c0_27 = arith.constant 0 : index
      %44 = vector.load %arg9[%c0_26, %c0_27] : memref<1x32xf32, #tpu.memory_space<vmem>>, vector<1x32xf32>
      %45 = vector.broadcast %44 : vector<1x32xf32> to vector<64x32xf32>
      %46 = arith.addf %43, %45 : vector<64x32xf32>
      %47 = arith.negf %46 : vector<64x32xf32>
      %48 = math.exp %47 : vector<64x32xf32>
      %cst_28 = arith.constant 1.000000e+00 : f32
      %49 = vector.broadcast %cst_28 : f32 to vector<64x32xf32>
      %50 = arith.addf %49, %48 : vector<64x32xf32>
      %51 = arith.divf %49, %50 : vector<64x32xf32>
      %52 = arith.mulf %46, %51 : vector<64x32xf32>
      %c0_29 = arith.constant 0 : index
      %c0_30 = arith.constant 0 : index
      %53 = vector.load %arg10[%c0_29, %c0_30] : memref<32x32xf32, #tpu.memory_space<vmem>>, vector<32x32xf32>
      %cst_31 = arith.constant dense<0.000000e+00> : vector<64x32xf32>
      %54 = tpu.matmul %52, %53, %cst_31 {dimension_numbers = #tpu.dot_dimension_numbers<[1], [0], [0], [1], [0, 0, 1, 1], [], []>} : vector<64x32xf32>, vector<32x32xf32>, vector<64x32xf32> -> vector<64x32xf32>
      %c0_32 = arith.constant 0 : index
      %c0_33 = arith.constant 0 : index
      %55 = vector.load %arg11[%c0_32, %c0_33] : memref<1x32xf32, #tpu.memory_space<vmem>>, vector<1x32xf32>
      %56 = vector.broadcast %55 : vector<1x32xf32> to vector<64x32xf32>
      %57 = arith.addf %54, %56 : vector<64x32xf32>
      %c0_34 = arith.constant 0 : index
      %c0_35 = arith.constant 0 : index
      %58 = vector.load %arg12[%c0_34, %c0_35] : memref<64x32xf32, #tpu.memory_space<vmem>>, vector<64x32xf32>
      tpu.vector_store %arg12[%c0_34, %c0_35], %57 {strides = array<i32>} : memref<64x32xf32, #tpu.memory_space<vmem>>, vector<64x32xf32>,
    } else {
    }
    return
  }
  func.func @transform_0(%arg0: i32, %arg1: i32) -> (i32, i32) {
    %c0_i32 = arith.constant 0 : i32
    %c0_i32_0 = arith.constant 0 : i32
    return %c0_i32, %arg1 : i32, i32
  }
  func.func @transform_1(%arg0: i32, %arg1: i32) -> (i32, i32) {
    %c0_i32 = arith.constant 0 : i32
    %c0_i32_0 = arith.constant 0 : i32
    return %arg0, %c0_i32 : i32, i32
  }
  func.func @transform_2(%arg0: i32, %arg1: i32) -> (i32, i32) {
    %c0_i32 = arith.constant 0 : i32
    %c0_i32_0 = arith.constant 0 : i32
    return %arg1, %c0_i32 : i32, i32
  }
  func.func @transform_3(%arg0: i32, %arg1: i32) -> (i32, i32) {
    %c0_i32 = arith.constant 0 : i32
    %c0_i32_0 = arith.constant 0 : i32
    %c0_i32_1 = arith.constant 0 : i32
    return %c0_i32, %c0_i32_0 : i32, i32
  }
  func.func @transform_4(%arg0: i32, %arg1: i32) -> (i32, i32) {
    %c0_i32 = arith.constant 0 : i32
    %c0_i32_0 = arith.constant 0 : i32
    %c0_i32_1 = arith.constant 0 : i32
    return %c0_i32, %c0_i32_0 : i32, i32
  }
  func.func @transform_5(%arg0: i32, %arg1: i32) -> (i32, i32) {
    %c0_i32 = arith.constant 0 : i32
    %c0_i32_0 = arith.constant 0 : i32
    %c0_i32_1 = arith.constant 0 : i32
    return %c0_i32, %c0_i32_0 : i32, i32
  }
  func.func @transform_6(%arg0: i32, %arg1: i32) -> (i32, i32) {
    %c0_i32 = arith.constant 0 : i32
    %c0_i32_0 = arith.constant 0 : i32
    %c0_i32_1 = arith.constant 0 : i32
    return %c0_i32, %c0_i32_0 : i32, i32
  }
  func.func @transform_7(%arg0: i32, %arg1: i32) -> (i32, i32) {
    %c0_i32 = arith.constant 0 : i32
    %c0_i32_0 = arith.constant 0 : i32
    %c0_i32_1 = arith.constant 0 : i32
    return %c0_i32, %c0_i32_0 : i32, i32
  }
  func.func @transform_8(%arg0: i32, %arg1: i32) -> (i32, i32) {
    %c0_i32 = arith.constant 0 : i32
    %c0_i32_0 = arith.constant 0 : i32
    %c0_i32_1 = arith.constant 0 : i32
    return %c0_i32, %c0_i32_0 : i32, i32
  }
  func.func @transform_9(%arg0: i32, %arg1: i32) -> (i32, i32) {
    %c0_i32 = arith.constant 0 : i32
    %c0_i32_0 = arith.constant 0 : i32
    %c0_i32_1 = arith.constant 0 : i32
    return %c0_i32, %c0_i32_0 : i32, i32
  }
  func.func @transform_10(%arg0: i32, %arg1: i32) -> (i32, i32) {
    %c0_i32 = arith.constant 0 : i32
    %c0_i32_0 = arith.constant 0 : i32
    return %arg0, %c0_i32 : i32, i32
  }
}

</mosaic_0001>

<llo_original>
// kernel: tpu_custom_call.1
$region0: #{tpu_custom_call.1}
  #allocation0 [shape = 'u32[]', space=smem, size = 0x4, offset = 0x4, fixed_abs, tag = 'smem constant byte address 0x4 - core index']
  #allocation1 [shape = 'u32[144,128]{1,0:T(1,128)}', space=vmem, size = 0x12000, scoped, tag = 'internal scratch']
  #allocation2 [shape = 'f32[64,33]{1,0:T(8,128)}', space=vmem, size = 0x8000, scoped, tag = 'scratch operand']
  %s0 = inlined_call_operand.vmem [shape: s32[1,640], index: 0, kind: input, shape index: {}]
  %s1 = inlined_call_operand.vmem [shape: f32[256,38], index: 1, kind: input, shape index: {}]
  %s2 = inlined_call_operand.vmem [shape: f32[640,33], index: 2, kind: input, shape index: {}]
  %s3 = inlined_call_operand.vmem [shape: f32[38,32], index: 3, kind: input, shape index: {}]
  %s4 = inlined_call_operand.vmem [shape: f32[32,32], index: 4, kind: input, shape index: {}]
  %s5 = inlined_call_operand.vmem [shape: f32[1,32], index: 5, kind: input, shape index: {}]
  %s6 = inlined_call_operand.vmem [shape: f32[32,32], index: 6, kind: input, shape index: {}]
  %s7 = inlined_call_operand.vmem [shape: f32[1,32], index: 7, kind: input, shape index: {}]
  %s8 = inlined_call_operand.vmem [shape: f32[32,32], index: 8, kind: input, shape index: {}]
  %s9 = inlined_call_operand.vmem [shape: f32[1,32], index: 9, kind: input, shape index: {}]
  %s10 = inlined_call_operand.vmem [shape: f32[256,32], index: 10, kind: output, shape index: {}]
  %s11 = sld [smem:[#allocation0]]
  $region81: #{tpu_custom_call.1} parent=0
    _
  %s13 = ssub.s32 1, %s11
  %s14 = scalar_select 0, %s13, %s11
  loop: start=0, step=1, limit=22
  $region2: #{tpu_custom_call.1} parent=0 // loop_pre_header
    _
  $region3: #{tpu_custom_call.1} parent=0 // loop_header
    %s16 = sphi 0, %s20
    %p17 = scmp.ge.s32.totalorder %s16, 22
    %s23 = sphi 0, %s35
    %s24 = sphi 0, %s31
    %s25 = sphi 0, %s23
    %s26 = sphi 0, %s24
    %s27 = sphi 0, %s25
    %s28 = sphi 0, %s26
    %s38 = sphi 0, %s40
    %s41 = sphi 0, %s38
    %s42 = sphi 0, %s41
    %s58 = sphi 0, %s42
    %s64 = sphi 0, %s66
    %s67 = sphi 0, %s64
    %s68 = sphi 0, %s67
    %s84 = sphi 0, %s68
    %s90 = sphi 0, %s92
    %s93 = sphi 0, %s90
    %s94 = sphi 0, %s93
    %s110 = sphi 0, %s94
    %s114 = sphi 0, %s114
    %s116 = sphi 0, %s114
    %s117 = sphi 0, %s116
    %s131 = sphi 0, %s117
    %s135 = sphi 0, %s135
    %s137 = sphi 0, %s135
    %s138 = sphi 0, %s137
    %s152 = sphi 0, %s138
    %s156 = sphi 0, %s156
    %s158 = sphi 0, %s156
    %s159 = sphi 0, %s158
    %s173 = sphi 0, %s159
    %s177 = sphi 0, %s177
    %s179 = sphi 0, %s177
    %s180 = sphi 0, %s179
    %s194 = sphi 0, %s180
    %s198 = sphi 0, %s198
    %s200 = sphi 0, %s198
    %s201 = sphi 0, %s200
    %s215 = sphi 0, %s201
    %s219 = sphi 0, %s219
    %s221 = sphi 0, %s219
    %s222 = sphi 0, %s221
    %s236 = sphi 0, %s222
    %s240 = sphi 0, %s240
    %s242 = sphi 0, %s240
    %s243 = sphi 0, %s242
    %s257 = sphi 0, %s243
    %s263 = sphi 0, %s265
    %s266 = sphi 0, %s263
    %s267 = sphi 0, %s266
    %s283 = sphi 0, %s267
  $region4: #{tpu_custom_call.1} parent=0 // loop_header_branch
    %19 = sbr.rel (%p17) target = $region8
  $region5: #{tpu_custom_call.1} parent=0 // loop_body
    %s21 = ssub.s32 %s16, 1
    %s22 = ssub.s32 %s16, 2
    %s29 = sadd.s32 1, %s24
    %p30 = scmp.ge.s32.totalorder %s29, 5
    %s31 = scalar_select %p30, 0, %s29
    %s32 = sadd.s32 1, %s23
    %s33 = scalar_select %p30, %s32, %s23
    %p34 = scmp.ge.s32.totalorder %s33, 4
    %s35 = scalar_select %p34, 0, %s33
    %s36 = ssub.s32 %s24, %s31
    %p37 = scmp.eq.s32.totalorder %s36, 0
    %s39 = sadd.s32 %s38, 1
    %s40 = scalar_select %p37, %s38, %s39
    %p43 = pneg %p37
    %p44 = scmp.eq.s32.totalorder %s16, 19
    %p45 = por %p43, %p44
    %p46 = scmp.ne.s32.totalorder %s38, %s41
    %p47 = scmp.eq.s32.totalorder %s16, 0
    %p48 = por %p46, %p47
    %p49 = scmp.ne.s32.totalorder %s38, %s41
    %p50 = scmp.eq.s32.totalorder %s21, 19
    %p51 = por %p49, %p50
    %p52 = scmp.ne.s32.totalorder %s41, %s42
    %p53 = scmp.eq.s32.totalorder %s21, 0
    %p54 = por %p52, %p53
    %p55 = scmp.ne.s32.totalorder %s41, %s42
    %p56 = scmp.eq.s32.totalorder %s22, 19
    %p57 = por %p55, %p56
    %p59 = scmp.ne.s32.totalorder %s42, %s58
    %p60 = scmp.eq.s32.totalorder %s22, 0
    %p61 = por %p59, %p60
    %s62 = ssub.s32 %s23, %s35
    %p63 = scmp.eq.s32.totalorder %s62, 0
    %s65 = sadd.s32 %s64, 1
    %s66 = scalar_select %p63, %s64, %s65
    %p69 = pneg %p63
    %p70 = scmp.eq.s32.totalorder %s16, 19
    %p71 = por %p69, %p70
    %p72 = scmp.ne.s32.totalorder %s64, %s67
    %p73 = scmp.eq.s32.totalorder %s16, 0
    %p74 = por %p72, %p73
    %p75 = scmp.ne.s32.totalorder %s64, %s67
    %p76 = scmp.eq.s32.totalorder %s21, 19
    %p77 = por %p75, %p76
    %p78 = scmp.ne.s32.totalorder %s67, %s68
    %p79 = scmp.eq.s32.totalorder %s21, 0
    %p80 = por %p78, %p79
    %p81 = scmp.ne.s32.totalorder %s67, %s68
    %p82 = scmp.eq.s32.totalorder %s22, 19
    %p83 = por %p81, %p82
    %p85 = scmp.ne.s32.totalorder %s68, %s84
    %p86 = scmp.eq.s32.totalorder %s22, 0
    %p87 = por %p85, %p86
    %s88 = ssub.s32 %s24, %s31
    %p89 = scmp.eq.s32.totalorder %s88, 0
    %s91 = sadd.s32 %s90, 1
    %s92 = scalar_select %p89, %s90, %s91
    %p95 = pneg %p89
    %p96 = scmp.eq.s32.totalorder %s16, 19
    %p97 = por %p95, %p96
    %p98 = scmp.ne.s32.totalorder %s90, %s93
    %p99 = scmp.eq.s32.totalorder %s16, 0
    %p100 = por %p98, %p99
    %p101 = scmp.ne.s32.totalorder %s90, %s93
    %p102 = scmp.eq.s32.totalorder %s21, 19
    %p103 = por %p101, %p102
    %p104 = scmp.ne.s32.totalorder %s93, %s94
    %p105 = scmp.eq.s32.totalorder %s21, 0
    %p106 = por %p104, %p105
    %p107 = scmp.ne.s32.totalorder %s93, %s94
    %p108 = scmp.eq.s32.totalorder %s22, 19
    %p109 = por %p107, %p108
    %p111 = scmp.ne.s32.totalorder %s94, %s110
    %p112 = scmp.eq.s32.totalorder %s22, 0
    %p113 = por %p111, %p112
    %s115 = sadd.s32 %s114, 1
    %p118 = scmp.eq.s32.totalorder %s16, 19
    %p119 = scmp.ne.s32.totalorder %s114, %s116
    %p120 = scmp.eq.s32.totalorder %s16, 0
    %p121 = por %p119, %p120
    %p122 = scmp.ne.s32.totalorder %s114, %s116
    %p123 = scmp.eq.s32.totalorder %s21, 19
    %p124 = por %p122, %p123
    %p125 = scmp.ne.s32.totalorder %s116, %s117
    %p126 = scmp.eq.s32.totalorder %s21, 0
    %p127 = por %p125, %p126
    %p128 = scmp.ne.s32.totalorder %s116, %s117
    %p129 = scmp.eq.s32.totalorder %s22, 19
    %p130 = por %p128, %p129
    %p132 = scmp.ne.s32.totalorder %s117, %s131
    %p133 = scmp.eq.s32.totalorder %s22, 0
    %p134 = por %p132, %p133
    %s136 = sadd.s32 %s135, 1
    %p139 = scmp.eq.s32.totalorder %s16, 19
    %p140 = scmp.ne.s32.totalorder %s135, %s137
    %p141 = scmp.eq.s32.totalorder %s16, 0
    %p142 = por %p140, %p141
    %p143 = scmp.ne.s32.totalorder %s135, %s137
    %p144 = scmp.eq.s32.totalorder %s21, 19
    %p145 = por %p143, %p144
    %p146 = scmp.ne.s32.totalorder %s137, %s138
    %p147 = scmp.eq.s32.totalorder %s21, 0
    %p148 = por %p146, %p147
    %p149 = scmp.ne.s32.totalorder %s137, %s138
    %p150 = scmp.eq.s32.totalorder %s22, 19
    %p151 = por %p149, %p150
    %p153 = scmp.ne.s32.totalorder %s138, %s152
    %p154 = scmp.eq.s32.totalorder %s22, 0
    %p155 = por %p153, %p154
    %s157 = sadd.s32 %s156, 1
    %p160 = scmp.eq.s32.totalorder %s16, 19
    %p161 = scmp.ne.s32.totalorder %s156, %s158
    %p162 = scmp.eq.s32.totalorder %s16, 0
    %p163 = por %p161, %p162
    %p164 = scmp.ne.s32.totalorder %s156, %s158
    %p165 = scmp.eq.s32.totalorder %s21, 19
    %p166 = por %p164, %p165
    %p167 = scmp.ne.s32.totalorder %s158, %s159
    %p168 = scmp.eq.s32.totalorder %s21, 0
    %p169 = por %p167, %p168
    %p170 = scmp.ne.s32.totalorder %s158, %s159
    %p171 = scmp.eq.s32.totalorder %s22, 19
    %p172 = por %p170, %p171
    %p174 = scmp.ne.s32.totalorder %s159, %s173
    %p175 = scmp.eq.s32.totalorder %s22, 0
    %p176 = por %p174, %p175
    %s178 = sadd.s32 %s177, 1
    %p181 = scmp.eq.s32.totalorder %s16, 19
    %p182 = scmp.ne.s32.totalorder %s177, %s179
    %p183 = scmp.eq.s32.totalorder %s16, 0
    %p184 = por %p182, %p183
    %p185 = scmp.ne.s32.totalorder %s177, %s179
    %p186 = scmp.eq.s32.totalorder %s21, 19
    %p187 = por %p185, %p186
    %p188 = scmp.ne.s32.totalorder %s179, %s180
    %p189 = scmp.eq.s32.totalorder %s21, 0
    %p190 = por %p188, %p189
    %p191 = scmp.ne.s32.totalorder %s179, %s180
    %p192 = scmp.eq.s32.totalorder %s22, 19
    %p193 = por %p191, %p192
    %p195 = scmp.ne.s32.totalorder %s180, %s194
    %p196 = scmp.eq.s32.totalorder %s22, 0
    %p197 = por %p195, %p196
    %s199 = sadd.s32 %s198, 1
    %p202 = scmp.eq.s32.totalorder %s16, 19
    %p203 = scmp.ne.s32.totalorder %s198, %s200
    %p204 = scmp.eq.s32.totalorder %s16, 0
    %p205 = por %p203, %p204
    %p206 = scmp.ne.s32.totalorder %s198, %s200
    %p207 = scmp.eq.s32.totalorder %s21, 19
    %p208 = por %p206, %p207
    %p209 = scmp.ne.s32.totalorder %s200, %s201
    %p210 = scmp.eq.s32.totalorder %s21, 0
    %p211 = por %p209, %p210
    %p212 = scmp.ne.s32.totalorder %s200, %s201
    %p213 = scmp.eq.s32.totalorder %s22, 19
    %p214 = por %p212, %p213
    %p216 = scmp.ne.s32.totalorder %s201, %s215
    %p217 = scmp.eq.s32.totalorder %s22, 0
    %p218 = por %p216, %p217
    %s220 = sadd.s32 %s219, 1
    %p223 = scmp.eq.s32.totalorder %s16, 19
    %p224 = scmp.ne.s32.totalorder %s219, %s221
    %p225 = scmp.eq.s32.totalorder %s16, 0
    %p226 = por %p224, %p225
    %p227 = scmp.ne.s32.totalorder %s219, %s221
    %p228 = scmp.eq.s32.totalorder %s21, 19
    %p229 = por %p227, %p228
    %p230 = scmp.ne.s32.totalorder %s221, %s222
    %p231 = scmp.eq.s32.totalorder %s21, 0
    %p232 = por %p230, %p231
    %p233 = scmp.ne.s32.totalorder %s221, %s222
    %p234 = scmp.eq.s32.totalorder %s22, 19
    %p235 = por %p233, %p234
    %p237 = scmp.ne.s32.totalorder %s222, %s236
    %p238 = scmp.eq.s32.totalorder %s22, 0
    %p239 = por %p237, %p238
    %s241 = sadd.s32 %s240, 1
    %p244 = scmp.eq.s32.totalorder %s16, 19
    %p245 = scmp.ne.s32.totalorder %s240, %s242
    %p246 = scmp.eq.s32.totalorder %s16, 0
    %p247 = por %p245, %p246
    %p248 = scmp.ne.s32.totalorder %s240, %s242
    %p249 = scmp.eq.s32.totalorder %s21, 19
    %p250 = por %p248, %p249
    %p251 = scmp.ne.s32.totalorder %s242, %s243
    %p252 = scmp.eq.s32.totalorder %s21, 0
    %p253 = por %p251, %p252
    %p254 = scmp.ne.s32.totalorder %s242, %s243
    %p255 = scmp.eq.s32.totalorder %s22, 19
    %p256 = por %p254, %p255
    %p258 = scmp.ne.s32.totalorder %s243, %s257
    %p259 = scmp.eq.s32.totalorder %s22, 0
    %p260 = por %p258, %p259
    %s261 = ssub.s32 %s23, %s35
    %p262 = scmp.eq.s32.totalorder %s261, 0
    %s264 = sadd.s32 %s263, 1
    %s265 = scalar_select %p262, %s263, %s264
    %p268 = pneg %p262
    %p269 = scmp.eq.s32.totalorder %s16, 19
    %p270 = por %p268, %p269
    %p271 = scmp.ne.s32.totalorder %s263, %s266
    %p272 = scmp.eq.s32.totalorder %s16, 0
    %p273 = por %p271, %p272
    %p274 = scmp.ne.s32.totalorder %s263, %s266
    %p275 = scmp.eq.s32.totalorder %s21, 19
    %p276 = por %p274, %p275
    %p277 = scmp.ne.s32.totalorder %s266, %s267
    %p278 = scmp.eq.s32.totalorder %s21, 0
    %p279 = por %p277, %p278
    %p280 = scmp.ne.s32.totalorder %s266, %s267
    %p281 = scmp.eq.s32.totalorder %s22, 19
    %p282 = por %p280, %p281
    %p284 = scmp.ne.s32.totalorder %s267, %s283
    %p285 = scmp.eq.s32.totalorder %s22, 0
    %p286 = por %p284, %p285
    %p287 = scmp.le.s32.totalorder 1, %s16
    %p288 = scmp.lt.s32.totalorder %s16, 21
    %p289 = pnand %p287, %p288
    %p290 = pneg %p289
    // Predicated region
    $region9: #{tpu_custom_call.1} parent=5 // pred_check
      _
    $region10: #{tpu_custom_call.1} parent=5 // pred_check_branch
      %292 = sbr.rel (%p289) target = $region12
    $region11: #{tpu_custom_call.1} parent=5 // pred_region
      %s293 = ssub.s32 %s16, 1
      // Predicated region
      $region13: #{tpu_custom_call.1} parent=11 // pred_check
        %p294 = pneg %p127
      $region14: #{tpu_custom_call.1} parent=11 // pred_check_branch
        %296 = sbr.rel (%p294) target = $region16
      $region15: #{tpu_custom_call.1} parent=11 // pred_region
        _
      $region16: #{tpu_custom_call.1} parent=11 // pred_fallthru
        _
      // Predicated region
      $region17: #{tpu_custom_call.1} parent=11 // pred_check
        %p297 = pneg %p148
      $region18: #{tpu_custom_call.1} parent=11 // pred_check_branch
        %299 = sbr.rel (%p297) target = $region20
      $region19: #{tpu_custom_call.1} parent=11 // pred_region
        _
      $region20: #{tpu_custom_call.1} parent=11 // pred_fallthru
        _
      // Predicated region
      $region21: #{tpu_custom_call.1} parent=11 // pred_check
        %p300 = pneg %p169
      $region22: #{tpu_custom_call.1} parent=11 // pred_check_branch
        %302 = sbr.rel (%p300) target = $region24
      $region23: #{tpu_custom_call.1} parent=11 // pred_region
        _
      $region24: #{tpu_custom_call.1} parent=11 // pred_fallthru
        _
      // Predicated region
      $region25: #{tpu_custom_call.1} parent=11 // pred_check
        %p303 = pneg %p190
      $region26: #{tpu_custom_call.1} parent=11 // pred_check_branch
        %305 = sbr.rel (%p303) target = $region28
      $region27: #{tpu_custom_call.1} parent=11 // pred_region
        _
      $region28: #{tpu_custom_call.1} parent=11 // pred_fallthru
        _
      // Predicated region
      $region29: #{tpu_custom_call.1} parent=11 // pred_check
        %p306 = pneg %p211
      $region30: #{tpu_custom_call.1} parent=11 // pred_check_branch
        %308 = sbr.rel (%p306) target = $region32
      $region31: #{tpu_custom_call.1} parent=11 // pred_region
        _
      $region32: #{tpu_custom_call.1} parent=11 // pred_fallthru
        _
      // Predicated region
      $region33: #{tpu_custom_call.1} parent=11 // pred_check
        %p309 = pneg %p232
      $region34: #{tpu_custom_call.1} parent=11 // pred_check_branch
        %311 = sbr.rel (%p309) target = $region36
      $region35: #{tpu_custom_call.1} parent=11 // pred_region
        _
      $region36: #{tpu_custom_call.1} parent=11 // pred_fallthru
        _
      // Predicated region
      $region37: #{tpu_custom_call.1} parent=11 // pred_check
        %p312 = pneg %p253
      $region38: #{tpu_custom_call.1} parent=11 // pred_check_branch
        %314 = sbr.rel (%p312) target = $region40
      $region39: #{tpu_custom_call.1} parent=11 // pred_region
        _
      $region40: #{tpu_custom_call.1} parent=11 // pred_fallthru
        _
    $region12: #{tpu_custom_call.1} parent=5 // pred_fallthru
      _
    %p315 = scmp.lt.s32.totalorder %s16, 20
    // Predicated region
    $region41: #{tpu_custom_call.1} parent=5 // pred_check
      %p316 = pneg %p315
    $region42: #{tpu_custom_call.1} parent=5 // pred_check_branch
      %318 = sbr.rel (%p316) target = $region44
    $region43: #{tpu_custom_call.1} parent=5 // pred_region
      // Predicated region
      $region45: #{tpu_custom_call.1} parent=43 // pred_check
        %p319 = pneg %p48
      $region46: #{tpu_custom_call.1} parent=43 // pred_check_branch
        %321 = sbr.rel (%p319) target = $region48
      $region47: #{tpu_custom_call.1} parent=43 // pred_region
        %p322 = scmp.lt.s32.totalorder %s24, 4
        %s323 = scalar_select %p322, %s24, 4
        %s324 = scalar_lea.vmem %s0, %s323
      $region48: #{tpu_custom_call.1} parent=43 // pred_fallthru
        _
      // Predicated region
      $region49: #{tpu_custom_call.1} parent=43 // pred_check
        %p325 = pneg %p74
      $region50: #{tpu_custom_call.1} parent=43 // pred_check_branch
        %327 = sbr.rel (%p325) target = $region52
      $region51: #{tpu_custom_call.1} parent=43 // pred_region
        %s328 = smul.u32 8, %s23
        %p329 = scmp.lt.s32.totalorder %s328, 31
        %s330 = scalar_select %p329, %s328, 31
        %s331 = smul.addr %s330, 8
        %s332 = scalar_lea.vmem %s1, %s331
        %s333 = smul.u32 8, %s23
      $region52: #{tpu_custom_call.1} parent=43 // pred_fallthru
        _
      // Predicated region
      $region53: #{tpu_custom_call.1} parent=43 // pred_check
        %p334 = pneg %p100
      $region54: #{tpu_custom_call.1} parent=43 // pred_check_branch
        %336 = sbr.rel (%p334) target = $region56
      $region55: #{tpu_custom_call.1} parent=43 // pred_region
        %s337 = smul.u32 16, %s24
        %p338 = scmp.lt.s32.totalorder %s337, 79
        %s339 = scalar_select %p338, %s337, 79
        %s340 = smul.addr %s339, 8
        %s341 = scalar_lea.vmem %s2, %s340
        %s342 = smul.u32 16, %s24
      $region56: #{tpu_custom_call.1} parent=43 // pred_fallthru
        _
    $region44: #{tpu_custom_call.1} parent=5 // pred_fallthru
      _
    %p343 = scmp.le.s32.totalorder 1, %s16
    %p344 = scmp.lt.s32.totalorder %s16, 21
    %p345 = pnand %p343, %p344
    %p346 = pneg %p345
    // Predicated region
    $region57: #{tpu_custom_call.1} parent=5 // pred_check
      _
    $region58: #{tpu_custom_call.1} parent=5 // pred_check_branch
      %348 = sbr.rel (%p345) target = $region60
    $region59: #{tpu_custom_call.1} parent=5 // pred_region
      %s349 = ssub.s32 %s16, 1
      %p350 = scmp.lt.s32.totalorder %s26, 4
      %s351 = scalar_select %p350, %s26, 4
      %s352 = scalar_lea.vmem %s0, %s351
      %p353 = pneg %p54
      %p354 = pneg %p51
      %s355 = smul.u32 8, %s25
      %p356 = scmp.lt.s32.totalorder %s355, 31
      %s357 = scalar_select %p356, %s355, 31
      %s358 = smul.addr %s357, 8
      %s359 = scalar_lea.vmem %s1, %s358
      %p360 = pneg %p80
      %p361 = pneg %p77
      %s362 = smul.u32 16, %s26
      %p363 = scmp.lt.s32.totalorder %s362, 79
      %s364 = scalar_select %p363, %s362, 79
      %s365 = smul.addr %s364, 8
      %s366 = scalar_lea.vmem %s2, %s365
      %p367 = pneg %p106
      %p368 = pneg %p103
      %p369 = pneg %p127
      %p370 = pneg %p124
      %p371 = pneg %p148
      %p372 = pneg %p145
      %p373 = pneg %p169
      %p374 = pneg %p166
      %p375 = pneg %p190
      %p376 = pneg %p187
      %p377 = pneg %p211
      %p378 = pneg %p208
      %p379 = pneg %p232
      %p380 = pneg %p229
      %p381 = pneg %p253
      %p382 = pneg %p250
      %p383 = pneg %p279
      %p384 = pneg %p276
      %s385 = smul.u32 8, %s25
      %p386 = scmp.lt.s32.totalorder %s385, 31
      %s387 = scalar_select %p386, %s385, 31
      %s388 = smul.addr %s387, 8
      %s389 = scalar_lea.vmem %s10, %s388
      %p390 = scmp.lt.s32.totalorder %s26, 4
      %s391 = scalar_select %p390, %s26, 4
      %s392 = scalar_lea.vmem %s0, %s391
      %s393 = smul.u32 8, %s25
      %p394 = scmp.lt.s32.totalorder %s393, 31
      %s395 = scalar_select %p394, %s393, 31
      %s396 = smul.addr %s395, 8
      %s397 = scalar_lea.vmem %s1, %s396
      %s398 = smul.u32 8, %s25
      %s399 = smul.u32 16, %s26
      %p400 = scmp.lt.s32.totalorder %s399, 79
      %s401 = scalar_select %p400, %s399, 79
      %s402 = smul.addr %s401, 8
      %s403 = scalar_lea.vmem %s2, %s402
      %s404 = smul.u32 16, %s26
      %s405 = smul.u32 8, %s25
      %p406 = scmp.lt.s32.totalorder %s405, 31
      %s407 = scalar_select %p406, %s405, 31
      %s408 = smul.addr %s407, 8
      %s409 = scalar_lea.vmem %s10, %s408
      %s410 = smul.u32 8, %s25
      %p411 = scmp.eq.s32.totalorder %s26, 0
      // Predicated region
      $region61: #{tpu_custom_call.1} parent=59 // pred_check
        %p412 = pneg %p411
      $region62: #{tpu_custom_call.1} parent=59 // pred_check_branch
        %414 = sbr.rel (%p412) target = $region64
      $region63: #{tpu_custom_call.1} parent=59 // pred_region
        %vm415 = vcmask 269312
        %416 = vst.msk [vmem:[#allocation2] sm:$0xff] %vm415, 0.0
        %417 = vst.msk [vmem:[#allocation2 + $0x8] sm:$0xff] %vm415, 0.0
        %418 = vst.msk [vmem:[#allocation2 + $0x10] sm:$0xff] %vm415, 0.0
        %419 = vst.msk [vmem:[#allocation2 + $0x18] sm:$0xff] %vm415, 0.0
        %420 = vst.msk [vmem:[#allocation2 + $0x20] sm:$0xff] %vm415, 0.0
        %421 = vst.msk [vmem:[#allocation2 + $0x28] sm:$0xff] %vm415, 0.0
        %422 = vst.msk [vmem:[#allocation2 + $0x30] sm:$0xff] %vm415, 0.0
        %423 = vst.msk [vmem:[#allocation2 + $0x38] sm:$0xff] %vm415, 0.0
      $region64: #{tpu_custom_call.1} parent=59 // pred_fallthru
        _
      %v424 = vld [vmem:[%s392] sm:$0x1]
      %s425 = smul.u32 %s25, 64
      %v426 = vlaneseq
      %v427 = vshrl.u32 %v426, 7
      %v428 = vadd.s32 %v427, 8
      %v429 = vadd.s32 %v427, 16
      %v430 = vadd.s32 %v427, 24
      %v431 = vadd.s32 %v427, 32
      %v432 = vadd.s32 %v427, 40
      %v433 = vadd.s32 %v427, 48
      %v434 = vadd.s32 %v427, 56
      %v435 = vstv %s425
      %v436 = vadd.s32 %v435, %v427
      %v437 = vadd.s32 %v435, %v428
      %v438 = vadd.s32 %v435, %v429
      %v439 = vadd.s32 %v435, %v430
      %v440 = vadd.s32 %v435, %v431
      %v441 = vadd.s32 %v435, %v432
      %v442 = vadd.s32 %v435, %v433
      %v443 = vadd.s32 %v435, %v434
      %v444 = vlaneseq
      %v445 = vshrl.u32 %v444, 7
      %v446 = vsub.s32 0, %v445
      %v447 = vrot.slane %v424, %v446
      %vm448 = vcmp.eq.s32.totalorder %v436, %v447
      %vm449 = vcmp.eq.s32.totalorder %v437, %v447
      %vm450 = vcmp.eq.s32.totalorder %v438, %v447
      %vm451 = vcmp.eq.s32.totalorder %v439, %v447
      %vm452 = vcmp.eq.s32.totalorder %v440, %v447
      %vm453 = vcmp.eq.s32.totalorder %v441, %v447
      %vm454 = vcmp.eq.s32.totalorder %v442, %v447
      %vm455 = vcmp.eq.s32.totalorder %v443, %v447
      %v456 = vsel %vm448, 1, 0
      %v457 = vsel %vm449, 1, 0
      %v458 = vsel %vm450, 1, 0
      %v459 = vsel %vm451, 1, 0
      %v460 = vsel %vm452, 1, 0
      %v461 = vsel %vm453, 1, 0
      %v462 = vsel %vm454, 1, 0
      %v463 = vsel %vm455, 1, 0
      %v464 = vcvt.s32.f32 %v456
      %v465 = vcvt.s32.f32 %v457
      %v466 = vcvt.s32.f32 %v458
      %v467 = vcvt.s32.f32 %v459
      %v468 = vcvt.s32.f32 %v460
      %v469 = vcvt.s32.f32 %v461
      %v470 = vcvt.s32.f32 %v462
      %v471 = vcvt.s32.f32 %v463
      %v472 = vld [vmem:[#allocation2] sm:$0xff]
      %v473 = vld [vmem:[#allocation2 + $0x8] sm:$0xff]
      %v474 = vld [vmem:[#allocation2 + $0x10] sm:$0xff]
      %v475 = vld [vmem:[#allocation2 + $0x18] sm:$0xff]
      %v476 = vld [vmem:[#allocation2 + $0x20] sm:$0xff]
      %v477 = vld [vmem:[#allocation2 + $0x28] sm:$0xff]
      %v478 = vld [vmem:[#allocation2 + $0x30] sm:$0xff]
      %v479 = vld [vmem:[#allocation2 + $0x38] sm:$0xff]
      %v480 = vld [vmem:[%s403] sm:$0xff]
      %v481 = vld [vmem:[%s403 + $0x8] sm:$0xff]
      %v482 = vld [vmem:[%s403 + $0x10] sm:$0xff]
      %v483 = vld [vmem:[%s403 + $0x18] sm:$0xff]
      %v484 = vld [vmem:[%s403 + $0x20] sm:$0xff]
      %v485 = vld [vmem:[%s403 + $0x28] sm:$0xff]
      %v486 = vld [vmem:[%s403 + $0x30] sm:$0xff]
      %v487 = vld [vmem:[%s403 + $0x38] sm:$0xff]
      %v488 = vld [vmem:[%s403 + $0x40] sm:$0xff]
      %v489 = vld [vmem:[%s403 + $0x48] sm:$0xff]
      %v490 = vld [vmem:[%s403 + $0x50] sm:$0xff]
      %v491 = vld [vmem:[%s403 + $0x58] sm:$0xff]
      %v492 = vld [vmem:[%s403 + $0x60] sm:$0xff]
      %v493 = vld [vmem:[%s403 + $0x68] sm:$0xff]
      %v494 = vld [vmem:[%s403 + $0x70] sm:$0xff]
      %v495 = vld [vmem:[%s403 + $0x78] sm:$0xff]
      %496 = vmatprep.subr.mxu0 0.0
      %497 = vmatpush1.msra.mxu0 %v480
      %498 = vmatprep.subr.mxu0 0.0
      %499 = vmatpush1.msra.mxu0 %v481
      %500 = vmatprep.subr.mxu0 0.0
      %501 = vmatpush1.msra.mxu0 %v482
      %502 = vmatprep.subr.mxu0 0.0
      %503 = vmatpush1.msra.mxu0 %v483
      %504 = vmatprep.subr.mxu0 0.0
      %505 = vmatpush1.msra.mxu0 %v484
      %506 = vmatprep.subr.mxu0 0.0
      %507 = vmatpush1.msra.mxu0 %v485
      %508 = vmatprep.subr.mxu0 0.0
      %509 = vmatpush1.msra.mxu0 %v486
      %510 = vmatprep.subr.mxu0 0.0
      %511 = vmatpush1.msra.mxu0 %v487
      %512 = vmatprep.subr.mxu0 0.0
      %513 = vmatpush1.msra.mxu0 %v488
      %514 = vmatprep.subr.mxu0 0.0
      %515 = vmatpush1.msra.mxu0 %v489
      %516 = vmatprep.subr.mxu0 0.0
      %517 = vmatpush1.msra.mxu0 %v490
      %518 = vmatprep.subr.mxu0 0.0
      %519 = vmatpush1.msra.mxu0 %v491
      %520 = vmatprep.subr.mxu0 0.0
      %521 = vmatpush1.msra.mxu0 %v492
      %522 = vmatprep.subr.mxu0 0.0
      %523 = vmatpush1.msra.mxu0 %v493
      %524 = vmatprep.subr.mxu0 0.0
      %525 = vmatpush1.msra.mxu0 %v494
      %526 = vmatprep.subr.mxu0 0.0
      %527 = vmatpush1.msra.mxu0 %v495
      %528 = vmatprep.subr.mxu0 0.0
      %529 = vmatpush1.msra.mxu0 0.0
      %530 = vmatprep.subr.mxu0 0.0
      %531 = vmatpush1.msra.mxu0 0.0
      %532 = vmatprep.subr.mxu0 0.0
      %533 = vmatpush1.msra.mxu0 0.0
      %534 = vmatprep.subr.mxu0 0.0
      %535 = vmatpush1.msra.mxu0 0.0
      %536 = vmatprep.subr.mxu0 0.0
      %537 = vmatpush1.msra.mxu0 0.0
      %538 = vmatprep.subr.mxu0 0.0
      %539 = vmatpush1.msra.mxu0 0.0
      %540 = vmatprep.subr.mxu0 0.0
      %541 = vmatpush1.msra.mxu0 0.0
      %542 = vmatprep.subr.mxu0 0.0
      %543 = vmatpush1.msra.mxu0 0.0
      %544 = vmatprep.subr.mxu0 0.0
      %545 = vmatpush1.msra.mxu0 0.0
      %546 = vmatprep.subr.mxu0 0.0
      %547 = vmatpush1.msra.mxu0 0.0
      %548 = vmatprep.subr.mxu0 0.0
      %549 = vmatpush1.msra.mxu0 0.0
      %550 = vmatprep.subr.mxu0 0.0
      %551 = vmatpush1.msra.mxu0 0.0
      %552 = vmatprep.subr.mxu0 0.0
      %553 = vmatpush1.msra.mxu0 0.0
      %554 = vmatprep.subr.mxu0 0.0
      %555 = vmatpush1.msra.mxu0 0.0
      %556 = vmatprep.subr.mxu0 0.0
      %557 = vmatpush1.msra.mxu0 0.0
      %558 = vmatprep.subr.mxu0 0.0
      %559 = vmatpush1.msra.mxu0 0.0
      %560 = vmatprep.mubr.f32.mxu0 0.0
      %561 = vmatmul.mubr.f32.gmra.mrb[0].mxu0 %v464
      %v562 = vpop.f32.mrb[0].mxu0
      %v563 = vadd.f32 0.0, %v562
      %v564 = vpop.f32.mrb[0].mxu0
      %565 = vmatprep.mubr.f32.mxu0 0.0
      %566 = vmatmul.mubr.f32.gmra.mrb[0].mxu0 %v465
      %v567 = vpop.f32.mrb[0].mxu0
      %v568 = vadd.f32 0.0, %v567
      %v569 = vpop.f32.mrb[0].mxu0
      %570 = vmatprep.mubr.f32.mxu0 0.0
      %571 = vmatmul.mubr.f32.gmra.mrb[0].mxu0 %v466
      %v572 = vpop.f32.mrb[0].mxu0
      %v573 = vadd.f32 0.0, %v572
      %v574 = vpop.f32.mrb[0].mxu0
      %575 = vmatprep.mubr.f32.mxu0 0.0
      %576 = vmatmul.mubr.f32.gmra.mrb[0].mxu0 %v467
      %v577 = vpop.f32.mrb[0].mxu0
      %v578 = vadd.f32 0.0, %v577
      %v579 = vpop.f32.mrb[0].mxu0
      %580 = vmatprep.mubr.f32.mxu0 0.0
      %581 = vmatmul.mubr.f32.gmra.mrb[0].mxu0 %v468
      %v582 = vpop.f32.mrb[0].mxu0
      %v583 = vadd.f32 0.0, %v582
      %v584 = vpop.f32.mrb[0].mxu0
      %585 = vmatprep.mubr.f32.mxu0 0.0
      %586 = vmatmul.mubr.f32.gmra.mrb[0].mxu0 %v469
      %v587 = vpop.f32.mrb[0].mxu0
      %v588 = vadd.f32 0.0, %v587
      %v589 = vpop.f32.mrb[0].mxu0
      %590 = vmatprep.mubr.f32.mxu0 0.0
      %591 = vmatmul.mubr.f32.gmra.mrb[0].mxu0 %v470
      %v592 = vpop.f32.mrb[0].mxu0
      %v593 = vadd.f32 0.0, %v592
      %v594 = vpop.f32.mrb[0].mxu0
      %595 = vmatprep.mubr.f32.mxu0 0.0
      %596 = vmatmul.mubr.f32.gmra.mrb[0].mxu0 %v471
      %v597 = vpop.f32.mrb[0].mxu0
      %v598 = vadd.f32 0.0, %v597
      %v599 = vpop.f32.mrb[0].mxu0
      %600 = vdwg.mxu0
      %v601 = vadd.f32 %v472, %v563
      %v602 = vadd.f32 %v473, %v568
      %v603 = vadd.f32 %v474, %v573
      %v604 = vadd.f32 %v475, %v578
      %v605 = vadd.f32 %v476, %v583
      %v606 = vadd.f32 %v477, %v588
      %v607 = vadd.f32 %v478, %v593
      %v608 = vadd.f32 %v479, %v598
      %vm609 = vcmask 269312
      %610 = vst.msk [vmem:[#allocation2] sm:$0xff] %vm609, %v601
      %611 = vst.msk [vmem:[#allocation2 + $0x8] sm:$0xff] %vm609, %v602
      %612 = vst.msk [vmem:[#allocation2 + $0x10] sm:$0xff] %vm609, %v603
      %613 = vst.msk [vmem:[#allocation2 + $0x18] sm:$0xff] %vm609, %v604
      %614 = vst.msk [vmem:[#allocation2 + $0x20] sm:$0xff] %vm609, %v605
      %615 = vst.msk [vmem:[#allocation2 + $0x28] sm:$0xff] %vm609, %v606
      %616 = vst.msk [vmem:[#allocation2 + $0x30] sm:$0xff] %vm609, %v607
      %617 = vst.msk [vmem:[#allocation2 + $0x38] sm:$0xff] %vm609, %v608
      %p618 = scmp.eq.s32.totalorder %s26, 4
      // Predicated region
      $region65: #{tpu_custom_call.1} parent=59 // pred_check
        %p619 = pneg %p618
      $region66: #{tpu_custom_call.1} parent=59 // pred_check_branch
        %621 = sbr.rel (%p619) target = $region68
      $region67: #{tpu_custom_call.1} parent=59 // pred_region
        %v622 = vld [vmem:[#allocation2] sm:$0xff]
        %v623 = vld [vmem:[#allocation2 + $0x8] sm:$0xff]
        %v624 = vld [vmem:[#allocation2 + $0x10] sm:$0xff]
        %v625 = vld [vmem:[#allocation2 + $0x18] sm:$0xff]
        %v626 = vld [vmem:[#allocation2 + $0x20] sm:$0xff]
        %v627 = vld [vmem:[#allocation2 + $0x28] sm:$0xff]
        %v628 = vld [vmem:[#allocation2 + $0x30] sm:$0xff]
        %v629 = vld [vmem:[#allocation2 + $0x38] sm:$0xff]
        %v630 = vmax.f32 %v622, 1.0
        %v631 = vmax.f32 %v623, 1.0
        %v632 = vmax.f32 %v624, 1.0
        %v633 = vmax.f32 %v625, 1.0
        %v634 = vmax.f32 %v626, 1.0
        %v635 = vmax.f32 %v627, 1.0
        %v636 = vmax.f32 %v628, 1.0
        %v637 = vmax.f32 %v629, 1.0
        %639 = vset.pattern.permute.xlu0 32
        %640 = vperm.xlu0 %639, %v630
        %v641 = vpop.permute.xlu0 %640
        %644 = vset.pattern.permute.xlu0 32
        %645 = vperm.xlu0 %644, %v631
        %v646 = vpop.permute.xlu0 %645
        %649 = vset.pattern.permute.xlu0 32
        %650 = vperm.xlu0 %649, %v632
        %v651 = vpop.permute.xlu0 %650
        %654 = vset.pattern.permute.xlu0 32
        %655 = vperm.xlu0 %654, %v633
        %v656 = vpop.permute.xlu0 %655
        %659 = vset.pattern.permute.xlu0 32
        %660 = vperm.xlu0 %659, %v634
        %v661 = vpop.permute.xlu0 %660
        %664 = vset.pattern.permute.xlu0 32
        %665 = vperm.xlu0 %664, %v635
        %v666 = vpop.permute.xlu0 %665
        %669 = vset.pattern.permute.xlu0 32
        %670 = vperm.xlu0 %669, %v636
        %v671 = vpop.permute.xlu0 %670
        %674 = vset.pattern.permute.xlu0 32
        %675 = vperm.xlu0 %674, %v637
        %v676 = vpop.permute.xlu0 %675
        %v678 = vrcp.pop %v641
        %v679 = vmul.f32 %v622, %v678
        %v680 = vrcp.pop %v646
        %v681 = vmul.f32 %v623, %v680
        %v682 = vrcp.pop %v651
        %v683 = vmul.f32 %v624, %v682
        %v684 = vrcp.pop %v656
        %v685 = vmul.f32 %v625, %v684
        %v686 = vrcp.pop %v661
        %v687 = vmul.f32 %v626, %v686
        %v688 = vrcp.pop %v666
        %v689 = vmul.f32 %v627, %v688
        %v690 = vrcp.pop %v671
        %v691 = vmul.f32 %v628, %v690
        %v692 = vrcp.pop %v676
        %v693 = vmul.f32 %v629, %v692
        %v694 = vld [vmem:[%s397] sm:$0xff]
        %v695 = vld [vmem:[%s397 + $0x8] sm:$0xff]
        %v696 = vld [vmem:[%s397 + $0x10] sm:$0xff]
        %v697 = vld [vmem:[%s397 + $0x18] sm:$0xff]
        %v698 = vld [vmem:[%s397 + $0x20] sm:$0xff]
        %v699 = vld [vmem:[%s397 + $0x28] sm:$0xff]
        %v700 = vld [vmem:[%s397 + $0x30] sm:$0xff]
        %v701 = vld [vmem:[%s397 + $0x38] sm:$0xff]
        %v702 = vld [vmem:[%s3] sm:$0xff]
        %v703 = vld [vmem:[%s3 + $0x8] sm:$0xff]
        %v704 = vld [vmem:[%s3 + $0x10] sm:$0xff]
        %v705 = vld [vmem:[%s3 + $0x18] sm:$0xff]
        %v706 = vld [vmem:[%s3 + $0x20] sm:$0x3f]
        %v707 = vld [vmem:[%s4] sm:$0xff]
        %v708 = vld [vmem:[%s4 + $0x8] sm:$0xff]
        %v709 = vld [vmem:[%s4 + $0x10] sm:$0xff]
        %v710 = vld [vmem:[%s4 + $0x18] sm:$0xff]
        %vm711 = vcmask 261120
        %v713 = vsel %vm711, %v679, 0
        %v716 = vsel %vm711, %v681, 0
        %v719 = vsel %vm711, %v683, 0
        %v722 = vsel %vm711, %v685, 0
        %v725 = vsel %vm711, %v687, 0
        %v728 = vsel %vm711, %v689, 0
        %v731 = vsel %vm711, %v691, 0
        %v734 = vsel %vm711, %v693, 0
        %736 = vmatprep.subr.mxu0 0.0
        %737 = vmatpush1.msra.mxu0 %v707
        %738 = vmatprep.subr.mxu0 0.0
        %739 = vmatpush1.msra.mxu0 %v708
        %740 = vmatprep.subr.mxu0 0.0
        %741 = vmatpush1.msra.mxu0 %v709
        %742 = vmatprep.subr.mxu0 0.0
        %743 = vmatpush1.msra.mxu0 %v710
        %744 = vmatprep.subr.mxu0 0.0
        %745 = vmatpush1.msra.mxu0 0.0
        %746 = vmatprep.subr.mxu0 0.0
        %747 = vmatpush1.msra.mxu0 0.0
        %748 = vmatprep.subr.mxu0 0.0
        %749 = vmatpush1.msra.mxu0 0.0
        %750 = vmatprep.subr.mxu0 0.0
        %751 = vmatpush1.msra.mxu0 0.0
        %752 = vmatprep.subr.mxu0 0.0
        %753 = vmatpush1.msra.mxu0 0.0
        %754 = vmatprep.subr.mxu0 0.0
        %755 = vmatpush1.msra.mxu0 0.0
        %756 = vmatprep.subr.mxu0 0.0
        %757 = vmatpush1.msra.mxu0 0.0
        %758 = vmatprep.subr.mxu0 0.0
        %759 = vmatpush1.msra.mxu0 0.0
        %760 = vmatprep.subr.mxu0 0.0
        %761 = vmatpush1.msra.mxu0 0.0
        %762 = vmatprep.subr.mxu0 0.0
        %763 = vmatpush1.msra.mxu0 0.0
        %764 = vmatprep.subr.mxu0 0.0
        %765 = vmatpush1.msra.mxu0 0.0
        %766 = vmatprep.subr.mxu0 0.0
        %767 = vmatpush1.msra.mxu0 0.0
        %768 = vmatprep.subr.mxu0 0.0
        %769 = vmatpush1.msra.mxu0 0.0
        %770 = vmatprep.subr.mxu0 0.0
        %771 = vmatpush1.msra.mxu0 0.0
        %772 = vmatprep.subr.mxu0 0.0
        %773 = vmatpush1.msra.mxu0 0.0
        %774 = vmatprep.subr.mxu0 0.0
        %775 = vmatpush1.msra.mxu0 0.0
        %776 = vmatprep.subr.mxu0 0.0
        %777 = vmatpush1.msra.mxu0 0.0
        %778 = vmatprep.subr.mxu0 0.0
        %779 = vmatpush1.msra.mxu0 0.0
        %780 = vmatprep.subr.mxu0 0.0
        %781 = vmatpush1.msra.mxu0 0.0
        %782 = vmatprep.subr.mxu0 0.0
        %783 = vmatpush1.msra.mxu0 0.0
        %784 = vmatprep.subr.mxu0 0.0
        %785 = vmatpush1.msra.mxu0 0.0
        %786 = vmatprep.subr.mxu0 0.0
        %787 = vmatpush1.msra.mxu0 0.0
        %788 = vmatprep.subr.mxu0 0.0
        %789 = vmatpush1.msra.mxu0 0.0
        %790 = vmatprep.subr.mxu0 0.0
        %791 = vmatpush1.msra.mxu0 0.0
        %792 = vmatprep.subr.mxu0 0.0
        %793 = vmatpush1.msra.mxu0 0.0
        %794 = vmatprep.subr.mxu0 0.0
        %795 = vmatpush1.msra.mxu0 0.0
        %796 = vmatprep.subr.mxu0 0.0
        %797 = vmatpush1.msra.mxu0 0.0
        %798 = vmatprep.subr.mxu0 0.0
        %799 = vmatpush1.msra.mxu0 0.0
        %800 = vmatprep.mubr.f32.mxu0 0.0
        %801 = vmatmul.mubr.f32.gmra.mrb[0].mxu0 %v713
        %v802 = vpop.f32.mrb[0].mxu0
        %v803 = vadd.f32 0.0, %v802
        %v804 = vpop.f32.mrb[0].mxu0
        %805 = vmatprep.mubr.f32.mxu0 0.0
        %806 = vmatmul.mubr.f32.gmra.mrb[0].mxu0 %v716
        %v807 = vpop.f32.mrb[0].mxu0
        %v808 = vadd.f32 0.0, %v807
        %v809 = vpop.f32.mrb[0].mxu0
        %810 = vmatprep.mubr.f32.mxu0 0.0
        %811 = vmatmul.mubr.f32.gmra.mrb[0].mxu0 %v719
        %v812 = vpop.f32.mrb[0].mxu0
        %v813 = vadd.f32 0.0, %v812
        %v814 = vpop.f32.mrb[0].mxu0
        %815 = vmatprep.mubr.f32.mxu0 0.0
        %816 = vmatmul.mubr.f32.gmra.mrb[0].mxu0 %v722
        %v817 = vpop.f32.mrb[0].mxu0
        %v818 = vadd.f32 0.0, %v817
        %v819 = vpop.f32.mrb[0].mxu0
        %820 = vmatprep.mubr.f32.mxu0 0.0
        %821 = vmatmul.mubr.f32.gmra.mrb[0].mxu0 %v725
        %v822 = vpop.f32.mrb[0].mxu0
        %v823 = vadd.f32 0.0, %v822
        %v824 = vpop.f32.mrb[0].mxu0
        %825 = vmatprep.mubr.f32.mxu0 0.0
        %826 = vmatmul.mubr.f32.gmra.mrb[0].mxu0 %v728
        %v827 = vpop.f32.mrb[0].mxu0
        %v828 = vadd.f32 0.0, %v827
        %v829 = vpop.f32.mrb[0].mxu0
        %830 = vmatprep.mubr.f32.mxu0 0.0
        %831 = vmatmul.mubr.f32.gmra.mrb[0].mxu0 %v731
        %v832 = vpop.f32.mrb[0].mxu0
        %v833 = vadd.f32 0.0, %v832
        %v834 = vpop.f32.mrb[0].mxu0
        %835 = vmatprep.mubr.f32.mxu0 0.0
        %836 = vmatmul.mubr.f32.gmra.mrb[0].mxu0 %v734
        %v837 = vpop.f32.mrb[0].mxu0
        %v838 = vadd.f32 0.0, %v837
        %v839 = vpop.f32.mrb[0].mxu0
        %840 = vdwg.mxu0
        %vm841 = vcmask 310272
        %v843 = vsel %vm841, %v694, 0
        %v846 = vsel %vm841, %v695, 0
        %v849 = vsel %vm841, %v696, 0
        %v852 = vsel %vm841, %v697, 0
        %v855 = vsel %vm841, %v698, 0
        %v858 = vsel %vm841, %v699, 0
        %v861 = vsel %vm841, %v700, 0
        %v864 = vsel %vm841, %v701, 0
        %vm866 = vcmask 1045504
        %v868 = vsel %vm866, %v706, 0
        %870 = vmatprep.subr.mxu0 0.0
        %871 = vmatpush1.msra.mxu0 %v702
        %872 = vmatprep.subr.mxu0 0.0
        %873 = vmatpush1.msra.mxu0 %v703
        %874 = vmatprep.subr.mxu0 0.0
        %875 = vmatpush1.msra.mxu0 %v704
        %876 = vmatprep.subr.mxu0 0.0
        %877 = vmatpush1.msra.mxu0 %v705
        %878 = vmatprep.subr.mxu0 0.0
        %879 = vmatpush1.msra.mxu0 %v868
        %880 = vmatprep.subr.mxu0 0.0
        %881 = vmatpush1.msra.mxu0 0.0
        %882 = vmatprep.subr.mxu0 0.0
        %883 = vmatpush1.msra.mxu0 0.0
        %884 = vmatprep.subr.mxu0 0.0
        %885 = vmatpush1.msra.mxu0 0.0
        %886 = vmatprep.subr.mxu0 0.0
        %887 = vmatpush1.msra.mxu0 0.0
        %888 = vmatprep.subr.mxu0 0.0
        %889 = vmatpush1.msra.mxu0 0.0
        %890 = vmatprep.subr.mxu0 0.0
        %891 = vmatpush1.msra.mxu0 0.0
        %892 = vmatprep.subr.mxu0 0.0
        %893 = vmatpush1.msra.mxu0 0.0
        %894 = vmatprep.subr.mxu0 0.0
        %895 = vmatpush1.msra.mxu0 0.0
        %896 = vmatprep.subr.mxu0 0.0
        %897 = vmatpush1.msra.mxu0 0.0
        %898 = vmatprep.subr.mxu0 0.0
        %899 = vmatpush1.msra.mxu0 0.0
        %900 = vmatprep.subr.mxu0 0.0
        %901 = vmatpush1.msra.mxu0 0.0
        %902 = vmatprep.subr.mxu0 0.0
        %903 = vmatpush1.msra.mxu0 0.0
        %904 = vmatprep.subr.mxu0 0.0
        %905 = vmatpush1.msra.mxu0 0.0
        %906 = vmatprep.subr.mxu0 0.0
        %907 = vmatpush1.msra.mxu0 0.0
        %908 = vmatprep.subr.mxu0 0.0
        %909 = vmatpush1.msra.mxu0 0.0
        %910 = vmatprep.subr.mxu0 0.0
        %911 = vmatpush1.msra.mxu0 0.0
        %912 = vmatprep.subr.mxu0 0.0
        %913 = vmatpush1.msra.mxu0 0.0
        %914 = vmatprep.subr.mxu0 0.0
        %915 = vmatpush1.msra.mxu0 0.0
        %916 = vmatprep.subr.mxu0 0.0
        %917 = vmatpush1.msra.mxu0 0.0
        %918 = vmatprep.subr.mxu0 0.0
        %919 = vmatpush1.msra.mxu0 0.0
        %920 = vmatprep.subr.mxu0 0.0
        %921 = vmatpush1.msra.mxu0 0.0
        %922 = vmatprep.subr.mxu0 0.0
        %923 = vmatpush1.msra.mxu0 0.0
        %924 = vmatprep.subr.mxu0 0.0
        %925 = vmatpush1.msra.mxu0 0.0
        %926 = vmatprep.subr.mxu0 0.0
        %927 = vmatpush1.msra.mxu0 0.0
        %928 = vmatprep.subr.mxu0 0.0
        %929 = vmatpush1.msra.mxu0 0.0
        %930 = vmatprep.subr.mxu0 0.0
        %931 = vmatpush1.msra.mxu0 0.0
        %932 = vmatprep.subr.mxu0 0.0
        %933 = vmatpush1.msra.mxu0 0.0
        %934 = vmatprep.mubr.f32.mxu0 0.0
        %935 = vmatmul.mubr.f32.gmra.mrb[0].mxu0 %v843
        %v936 = vpop.f32.mrb[0].mxu0
        %v937 = vadd.f32 %v803, %v936
        %v938 = vpop.f32.mrb[0].mxu0
        %939 = vmatprep.mubr.f32.mxu0 0.0
        %940 = vmatmul.mubr.f32.gmra.mrb[0].mxu0 %v846
        %v941 = vpop.f32.mrb[0].mxu0
        %v942 = vadd.f32 %v808, %v941
        %v943 = vpop.f32.mrb[0].mxu0
        %944 = vmatprep.mubr.f32.mxu0 0.0
        %945 = vmatmul.mubr.f32.gmra.mrb[0].mxu0 %v849
        %v946 = vpop.f32.mrb[0].mxu0
        %v947 = vadd.f32 %v813, %v946
        %v948 = vpop.f32.mrb[0].mxu0
        %949 = vmatprep.mubr.f32.mxu0 0.0
        %950 = vmatmul.mubr.f32.gmra.mrb[0].mxu0 %v852
        %v951 = vpop.f32.mrb[0].mxu0
        %v952 = vadd.f32 %v818, %v951
        %v953 = vpop.f32.mrb[0].mxu0
        %954 = vmatprep.mubr.f32.mxu0 0.0
        %955 = vmatmul.mubr.f32.gmra.mrb[0].mxu0 %v855
        %v956 = vpop.f32.mrb[0].mxu0
        %v957 = vadd.f32 %v823, %v956
        %v958 = vpop.f32.mrb[0].mxu0
        %959 = vmatprep.mubr.f32.mxu0 0.0
        %960 = vmatmul.mubr.f32.gmra.mrb[0].mxu0 %v858
        %v961 = vpop.f32.mrb[0].mxu0
        %v962 = vadd.f32 %v828, %v961
        %v963 = vpop.f32.mrb[0].mxu0
        %964 = vmatprep.mubr.f32.mxu0 0.0
        %965 = vmatmul.mubr.f32.gmra.mrb[0].mxu0 %v861
        %v966 = vpop.f32.mrb[0].mxu0
        %v967 = vadd.f32 %v833, %v966
        %v968 = vpop.f32.mrb[0].mxu0
        %969 = vmatprep.mubr.f32.mxu0 0.0
        %970 = vmatmul.mubr.f32.gmra.mrb[0].mxu0 %v864
        %v971 = vpop.f32.mrb[0].mxu0
        %v972 = vadd.f32 %v838, %v971
        %v973 = vpop.f32.mrb[0].mxu0
        %974 = vdwg.mxu0
        %v975 = vld [vmem:[%s5] sm:$0x1]
        %v977 = vlaneseq
        %v978 = vshrl.u32 %v977, 7
        %v979 = vsub.s32 0, %v978
        %v980 = vrot.slane %v975, %v979
        %v982 = vadd.f32 %v937, %v980
        %v983 = vadd.f32 %v942, %v980
        %v984 = vadd.f32 %v947, %v980
        %v985 = vadd.f32 %v952, %v980
        %v986 = vadd.f32 %v957, %v980
        %v987 = vadd.f32 %v962, %v980
        %v988 = vadd.f32 %v967, %v980
        %v989 = vadd.f32 %v972, %v980
        %v990 = vxor.u32 %v982, 2147483648
        %v991 = vxor.u32 %v983, 2147483648
        %v992 = vxor.u32 %v984, 2147483648
        %v993 = vxor.u32 %v985, 2147483648
        %v994 = vxor.u32 %v986, 2147483648
        %v995 = vxor.u32 %v987, 2147483648
        %v996 = vxor.u32 %v988, 2147483648
        %v997 = vxor.u32 %v989, 2147483648
        %v998 = vmul.f32 %v990, 1.442695
        %v999 = vpow.pop %v998
        %v1000 = vmul.f32 %v991, 1.442695
        %v1001 = vpow.pop %v1000
        %v1002 = vmul.f32 %v992, 1.442695
        %v1003 = vpow.pop %v1002
        %v1004 = vmul.f32 %v993, 1.442695
        %v1005 = vpow.pop %v1004
        %v1006 = vmul.f32 %v994, 1.442695
        %v1007 = vpow.pop %v1006
        %v1008 = vmul.f32 %v995, 1.442695
        %v1009 = vpow.pop %v1008
        %v1010 = vmul.f32 %v996, 1.442695
        %v1011 = vpow.pop %v1010
        %v1012 = vmul.f32 %v997, 1.442695
        %v1013 = vpow.pop %v1012
        %v1014 = vadd.f32 %v999, 1.0
        %v1015 = vadd.f32 %v1001, 1.0
        %v1016 = vadd.f32 %v1003, 1.0
        %v1017 = vadd.f32 %v1005, 1.0
        %v1018 = vadd.f32 %v1007, 1.0
        %v1019 = vadd.f32 %v1009, 1.0
        %v1020 = vadd.f32 %v1011, 1.0
        %v1021 = vadd.f32 %v1013, 1.0
        %v1022 = vrcp.pop %v1014
        %v1023 = vmul.f32 1.0, %v1022
        %v1024 = vrcp.pop %v1015
        %v1025 = vmul.f32 1.0, %v1024
        %v1026 = vrcp.pop %v1016
        %v1027 = vmul.f32 1.0, %v1026
        %v1028 = vrcp.pop %v1017
        %v1029 = vmul.f32 1.0, %v1028
        %v1030 = vrcp.pop %v1018
        %v1031 = vmul.f32 1.0, %v1030
        %v1032 = vrcp.pop %v1019
        %v1033 = vmul.f32 1.0, %v1032
        %v1034 = vrcp.pop %v1020
        %v1035 = vmul.f32 1.0, %v1034
        %v1036 = vrcp.pop %v1021
        %v1037 = vmul.f32 1.0, %v1036
        %v1038 = vmul.f32 %v982, %v1023
        %v1039 = vmul.f32 %v983, %v1025
        %v1040 = vmul.f32 %v984, %v1027
        %v1041 = vmul.f32 %v985, %v1029
        %v1042 = vmul.f32 %v986, %v1031
        %v1043 = vmul.f32 %v987, %v1033
        %v1044 = vmul.f32 %v988, %v1035
        %v1045 = vmul.f32 %v989, %v1037
        %v1046 = vld [vmem:[%s6] sm:$0xff]
        %v1047 = vld [vmem:[%s6 + $0x8] sm:$0xff]
        %v1048 = vld [vmem:[%s6 + $0x10] sm:$0xff]
        %v1049 = vld [vmem:[%s6 + $0x18] sm:$0xff]
        %v1050 = vld [vmem:[%s7] sm:$0x1]
        %v1052 = vlaneseq
        %v1053 = vshrl.u32 %v1052, 7
        %v1054 = vsub.s32 0, %v1053
        %v1055 = vrot.slane %v1050, %v1054
        %v1058 = vsel %vm711, %v1038, 0
        %v1061 = vsel %vm711, %v1039, 0
        %v1064 = vsel %vm711, %v1040, 0
        %v1067 = vsel %vm711, %v1041, 0
        %v1070 = vsel %vm711, %v1042, 0
        %v1073 = vsel %vm711, %v1043, 0
        %v1076 = vsel %vm711, %v1044, 0
        %v1079 = vsel %vm711, %v1045, 0
        %1081 = vmatprep.subr.mxu0 0.0
        %1082 = vmatpush1.msra.mxu0 %v1046
        %1083 = vmatprep.subr.mxu0 0.0
        %1084 = vmatpush1.msra.mxu0 %v1047
        %1085 = vmatprep.subr.mxu0 0.0
        %1086 = vmatpush1.msra.mxu0 %v1048
        %1087 = vmatprep.subr.mxu0 0.0
        %1088 = vmatpush1.msra.mxu0 %v1049
        %1089 = vmatprep.subr.mxu0 0.0
        %1090 = vmatpush1.msra.mxu0 0.0
        %1091 = vmatprep.subr.mxu0 0.0
        %1092 = vmatpush1.msra.mxu0 0.0
        %1093 = vmatprep.subr.mxu0 0.0
        %1094 = vmatpush1.msra.mxu0 0.0
        %1095 = vmatprep.subr.mxu0 0.0
        %1096 = vmatpush1.msra.mxu0 0.0
        %1097 = vmatprep.subr.mxu0 0.0
        %1098 = vmatpush1.msra.mxu0 0.0
        %1099 = vmatprep.subr.mxu0 0.0
        %1100 = vmatpush1.msra.mxu0 0.0
        %1101 = vmatprep.subr.mxu0 0.0
        %1102 = vmatpush1.msra.mxu0 0.0
        %1103 = vmatprep.subr.mxu0 0.0
        %1104 = vmatpush1.msra.mxu0 0.0
        %1105 = vmatprep.subr.mxu0 0.0
        %1106 = vmatpush1.msra.mxu0 0.0
        %1107 = vmatprep.subr.mxu0 0.0
        %1108 = vmatpush1.msra.mxu0 0.0
        %1109 = vmatprep.subr.mxu0 0.0
        %1110 = vmatpush1.msra.mxu0 0.0
        %1111 = vmatprep.subr.mxu0 0.0
        %1112 = vmatpush1.msra.mxu0 0.0
        %1113 = vmatprep.subr.mxu0 0.0
        %1114 = vmatpush1.msra.mxu0 0.0
        %1115 = vmatprep.subr.mxu0 0.0
        %1116 = vmatpush1.msra.mxu0 0.0
        %1117 = vmatprep.subr.mxu0 0.0
        %1118 = vmatpush1.msra.mxu0 0.0
        %1119 = vmatprep.subr.mxu0 0.0
        %1120 = vmatpush1.msra.mxu0 0.0
        %1121 = vmatprep.subr.mxu0 0.0
        %1122 = vmatpush1.msra.mxu0 0.0
        %1123 = vmatprep.subr.mxu0 0.0
        %1124 = vmatpush1.msra.mxu0 0.0
        %1125 = vmatprep.subr.mxu0 0.0
        %1126 = vmatpush1.msra.mxu0 0.0
        %1127 = vmatprep.subr.mxu0 0.0
        %1128 = vmatpush1.msra.mxu0 0.0
        %1129 = vmatprep.subr.mxu0 0.0
        %1130 = vmatpush1.msra.mxu0 0.0
        %1131 = vmatprep.subr.mxu0 0.0
        %1132 = vmatpush1.msra.mxu0 0.0
        %1133 = vmatprep.subr.mxu0 0.0
        %1134 = vmatpush1.msra.mxu0 0.0
        %1135 = vmatprep.subr.mxu0 0.0
        %1136 = vmatpush1.msra.mxu0 0.0
        %1137 = vmatprep.subr.mxu0 0.0
        %1138 = vmatpush1.msra.mxu0 0.0
        %1139 = vmatprep.subr.mxu0 0.0
        %1140 = vmatpush1.msra.mxu0 0.0
        %1141 = vmatprep.subr.mxu0 0.0
        %1142 = vmatpush1.msra.mxu0 0.0
        %1143 = vmatprep.subr.mxu0 0.0
        %1144 = vmatpush1.msra.mxu0 0.0
        %1145 = vmatprep.mubr.f32.mxu0 0.0
        %1146 = vmatmul.mubr.f32.gmra.mrb[0].mxu0 %v1058
        %v1147 = vpop.f32.mrb[0].mxu0
        %v1148 = vadd.f32 %v1055, %v1147
        %v1149 = vpop.f32.mrb[0].mxu0
        %1150 = vmatprep.mubr.f32.mxu0 0.0
        %1151 = vmatmul.mubr.f32.gmra.mrb[0].mxu0 %v1061
        %v1152 = vpop.f32.mrb[0].mxu0
        %v1153 = vadd.f32 %v1055, %v1152
        %v1154 = vpop.f32.mrb[0].mxu0
        %1155 = vmatprep.mubr.f32.mxu0 0.0
        %1156 = vmatmul.mubr.f32.gmra.mrb[0].mxu0 %v1064
        %v1157 = vpop.f32.mrb[0].mxu0
        %v1158 = vadd.f32 %v1055, %v1157
        %v1159 = vpop.f32.mrb[0].mxu0
        %1160 = vmatprep.mubr.f32.mxu0 0.0
        %1161 = vmatmul.mubr.f32.gmra.mrb[0].mxu0 %v1067
        %v1162 = vpop.f32.mrb[0].mxu0
        %v1163 = vadd.f32 %v1055, %v1162
        %v1164 = vpop.f32.mrb[0].mxu0
        %1165 = vmatprep.mubr.f32.mxu0 0.0
        %1166 = vmatmul.mubr.f32.gmra.mrb[0].mxu0 %v1070
        %v1167 = vpop.f32.mrb[0].mxu0
        %v1168 = vadd.f32 %v1055, %v1167
        %v1169 = vpop.f32.mrb[0].mxu0
        %1170 = vmatprep.mubr.f32.mxu0 0.0
        %1171 = vmatmul.mubr.f32.gmra.mrb[0].mxu0 %v1073
        %v1172 = vpop.f32.mrb[0].mxu0
        %v1173 = vadd.f32 %v1055, %v1172
        %v1174 = vpop.f32.mrb[0].mxu0
        %1175 = vmatprep.mubr.f32.mxu0 0.0
        %1176 = vmatmul.mubr.f32.gmra.mrb[0].mxu0 %v1076
        %v1177 = vpop.f32.mrb[0].mxu0
        %v1178 = vadd.f32 %v1055, %v1177
        %v1179 = vpop.f32.mrb[0].mxu0
        %1180 = vmatprep.mubr.f32.mxu0 0.0
        %1181 = vmatmul.mubr.f32.gmra.mrb[0].mxu0 %v1079
        %v1182 = vpop.f32.mrb[0].mxu0
        %v1183 = vadd.f32 %v1055, %v1182
        %v1184 = vpop.f32.mrb[0].mxu0
        %1185 = vdwg.mxu0
        %v1186 = vxor.u32 %v1148, 2147483648
        %v1187 = vxor.u32 %v1153, 2147483648
        %v1188 = vxor.u32 %v1158, 2147483648
        %v1189 = vxor.u32 %v1163, 2147483648
        %v1190 = vxor.u32 %v1168, 2147483648
        %v1191 = vxor.u32 %v1173, 2147483648
        %v1192 = vxor.u32 %v1178, 2147483648
        %v1193 = vxor.u32 %v1183, 2147483648
        %v1194 = vmul.f32 %v1186, 1.442695
        %v1195 = vpow.pop %v1194
        %v1196 = vmul.f32 %v1187, 1.442695
        %v1197 = vpow.pop %v1196
        %v1198 = vmul.f32 %v1188, 1.442695
        %v1199 = vpow.pop %v1198
        %v1200 = vmul.f32 %v1189, 1.442695
        %v1201 = vpow.pop %v1200
        %v1202 = vmul.f32 %v1190, 1.442695
        %v1203 = vpow.pop %v1202
        %v1204 = vmul.f32 %v1191, 1.442695
        %v1205 = vpow.pop %v1204
        %v1206 = vmul.f32 %v1192, 1.442695
        %v1207 = vpow.pop %v1206
        %v1208 = vmul.f32 %v1193, 1.442695
        %v1209 = vpow.pop %v1208
        %v1210 = vadd.f32 %v1195, 1.0
        %v1211 = vadd.f32 %v1197, 1.0
        %v1212 = vadd.f32 %v1199, 1.0
        %v1213 = vadd.f32 %v1201, 1.0
        %v1214 = vadd.f32 %v1203, 1.0
        %v1215 = vadd.f32 %v1205, 1.0
        %v1216 = vadd.f32 %v1207, 1.0
        %v1217 = vadd.f32 %v1209, 1.0
        %v1218 = vrcp.pop %v1210
        %v1219 = vmul.f32 1.0, %v1218
        %v1220 = vrcp.pop %v1211
        %v1221 = vmul.f32 1.0, %v1220
        %v1222 = vrcp.pop %v1212
        %v1223 = vmul.f32 1.0, %v1222
        %v1224 = vrcp.pop %v1213
        %v1225 = vmul.f32 1.0, %v1224
        %v1226 = vrcp.pop %v1214
        %v1227 = vmul.f32 1.0, %v1226
        %v1228 = vrcp.pop %v1215
        %v1229 = vmul.f32 1.0, %v1228
        %v1230 = vrcp.pop %v1216
        %v1231 = vmul.f32 1.0, %v1230
        %v1232 = vrcp.pop %v1217
        %v1233 = vmul.f32 1.0, %v1232
        %v1234 = vmul.f32 %v1148, %v1219
        %v1235 = vmul.f32 %v1153, %v1221
        %v1236 = vmul.f32 %v1158, %v1223
        %v1237 = vmul.f32 %v1163, %v1225
        %v1238 = vmul.f32 %v1168, %v1227
        %v1239 = vmul.f32 %v1173, %v1229
        %v1240 = vmul.f32 %v1178, %v1231
        %v1241 = vmul.f32 %v1183, %v1233
        %v1242 = vld [vmem:[%s8] sm:$0xff]
        %v1243 = vld [vmem:[%s8 + $0x8] sm:$0xff]
        %v1244 = vld [vmem:[%s8 + $0x10] sm:$0xff]
        %v1245 = vld [vmem:[%s8 + $0x18] sm:$0xff]
        %v1246 = vld [vmem:[%s9] sm:$0x1]
        %v1248 = vlaneseq
        %v1249 = vshrl.u32 %v1248, 7
        %v1250 = vsub.s32 0, %v1249
        %v1251 = vrot.slane %v1246, %v1250
        %v1254 = vsel %vm711, %v1234, 0
        %v1257 = vsel %vm711, %v1235, 0
        %v1260 = vsel %vm711, %v1236, 0
        %v1263 = vsel %vm711, %v1237, 0
        %v1266 = vsel %vm711, %v1238, 0
        %v1269 = vsel %vm711, %v1239, 0
        %v1272 = vsel %vm711, %v1240, 0
        %v1275 = vsel %vm711, %v1241, 0
        %1277 = vmatprep.subr.mxu0 0.0
        %1278 = vmatpush1.msra.mxu0 %v1242
        %1279 = vmatprep.subr.mxu0 0.0
        %1280 = vmatpush1.msra.mxu0 %v1243
        %1281 = vmatprep.subr.mxu0 0.0
        %1282 = vmatpush1.msra.mxu0 %v1244
        %1283 = vmatprep.subr.mxu0 0.0
        %1284 = vmatpush1.msra.mxu0 %v1245
        %1285 = vmatprep.subr.mxu0 0.0
        %1286 = vmatpush1.msra.mxu0 0.0
        %1287 = vmatprep.subr.mxu0 0.0
        %1288 = vmatpush1.msra.mxu0 0.0
        %1289 = vmatprep.subr.mxu0 0.0
        %1290 = vmatpush1.msra.mxu0 0.0
        %1291 = vmatprep.subr.mxu0 0.0
        %1292 = vmatpush1.msra.mxu0 0.0
        %1293 = vmatprep.subr.mxu0 0.0
        %1294 = vmatpush1.msra.mxu0 0.0
        %1295 = vmatprep.subr.mxu0 0.0
        %1296 = vmatpush1.msra.mxu0 0.0
        %1297 = vmatprep.subr.mxu0 0.0
        %1298 = vmatpush1.msra.mxu0 0.0
        %1299 = vmatprep.subr.mxu0 0.0
        %1300 = vmatpush1.msra.mxu0 0.0
        %1301 = vmatprep.subr.mxu0 0.0
        %1302 = vmatpush1.msra.mxu0 0.0
        %1303 = vmatprep.subr.mxu0 0.0
        %1304 = vmatpush1.msra.mxu0 0.0
        %1305 = vmatprep.subr.mxu0 0.0
        %1306 = vmatpush1.msra.mxu0 0.0
        %1307 = vmatprep.subr.mxu0 0.0
        %1308 = vmatpush1.msra.mxu0 0.0
        %1309 = vmatprep.subr.mxu0 0.0
        %1310 = vmatpush1.msra.mxu0 0.0
        %1311 = vmatprep.subr.mxu0 0.0
        %1312 = vmatpush1.msra.mxu0 0.0
        %1313 = vmatprep.subr.mxu0 0.0
        %1314 = vmatpush1.msra.mxu0 0.0
        %1315 = vmatprep.subr.mxu0 0.0
        %1316 = vmatpush1.msra.mxu0 0.0
        %1317 = vmatprep.subr.mxu0 0.0
        %1318 = vmatpush1.msra.mxu0 0.0
        %1319 = vmatprep.subr.mxu0 0.0
        %1320 = vmatpush1.msra.mxu0 0.0
        %1321 = vmatprep.subr.mxu0 0.0
        %1322 = vmatpush1.msra.mxu0 0.0
        %1323 = vmatprep.subr.mxu0 0.0
        %1324 = vmatpush1.msra.mxu0 0.0
        %1325 = vmatprep.subr.mxu0 0.0
        %1326 = vmatpush1.msra.mxu0 0.0
        %1327 = vmatprep.subr.mxu0 0.0
        %1328 = vmatpush1.msra.mxu0 0.0
        %1329 = vmatprep.subr.mxu0 0.0
        %1330 = vmatpush1.msra.mxu0 0.0
        %1331 = vmatprep.subr.mxu0 0.0
        %1332 = vmatpush1.msra.mxu0 0.0
        %1333 = vmatprep.subr.mxu0 0.0
        %1334 = vmatpush1.msra.mxu0 0.0
        %1335 = vmatprep.subr.mxu0 0.0
        %1336 = vmatpush1.msra.mxu0 0.0
        %1337 = vmatprep.subr.mxu0 0.0
        %1338 = vmatpush1.msra.mxu0 0.0
        %1339 = vmatprep.subr.mxu0 0.0
        %1340 = vmatpush1.msra.mxu0 0.0
        %1341 = vmatprep.mubr.f32.mxu0 0.0
        %1342 = vmatmul.mubr.f32.gmra.mrb[0].mxu0 %v1254
        %v1343 = vpop.f32.mrb[0].mxu0
        %v1344 = vadd.f32 %v1251, %v1343
        %v1345 = vpop.f32.mrb[0].mxu0
        %1346 = vmatprep.mubr.f32.mxu0 0.0
        %1347 = vmatmul.mubr.f32.gmra.mrb[0].mxu0 %v1257
        %v1348 = vpop.f32.mrb[0].mxu0
        %v1349 = vadd.f32 %v1251, %v1348
        %v1350 = vpop.f32.mrb[0].mxu0
        %1351 = vmatprep.mubr.f32.mxu0 0.0
        %1352 = vmatmul.mubr.f32.gmra.mrb[0].mxu0 %v1260
        %v1353 = vpop.f32.mrb[0].mxu0
        %v1354 = vadd.f32 %v1251, %v1353
        %v1355 = vpop.f32.mrb[0].mxu0
        %1356 = vmatprep.mubr.f32.mxu0 0.0
        %1357 = vmatmul.mubr.f32.gmra.mrb[0].mxu0 %v1263
        %v1358 = vpop.f32.mrb[0].mxu0
        %v1359 = vadd.f32 %v1251, %v1358
        %v1360 = vpop.f32.mrb[0].mxu0
        %1361 = vmatprep.mubr.f32.mxu0 0.0
        %1362 = vmatmul.mubr.f32.gmra.mrb[0].mxu0 %v1266
        %v1363 = vpop.f32.mrb[0].mxu0
        %v1364 = vadd.f32 %v1251, %v1363
        %v1365 = vpop.f32.mrb[0].mxu0
        %1366 = vmatprep.mubr.f32.mxu0 0.0
        %1367 = vmatmul.mubr.f32.gmra.mrb[0].mxu0 %v1269
        %v1368 = vpop.f32.mrb[0].mxu0
        %v1369 = vadd.f32 %v1251, %v1368
        %v1370 = vpop.f32.mrb[0].mxu0
        %1371 = vmatprep.mubr.f32.mxu0 0.0
        %1372 = vmatmul.mubr.f32.gmra.mrb[0].mxu0 %v1272
        %v1373 = vpop.f32.mrb[0].mxu0
        %v1374 = vadd.f32 %v1251, %v1373
        %v1375 = vpop.f32.mrb[0].mxu0
        %1376 = vmatprep.mubr.f32.mxu0 0.0
        %1377 = vmatmul.mubr.f32.gmra.mrb[0].mxu0 %v1275
        %v1378 = vpop.f32.mrb[0].mxu0
        %v1379 = vadd.f32 %v1251, %v1378
        %v1380 = vpop.f32.mrb[0].mxu0
        %1381 = vdwg.mxu0
        %1382 = vst.msk [vmem:[%s409] sm:$0xff] %vm711, %v1344
        %1383 = vst.msk [vmem:[%s409 + $0x8] sm:$0xff] %vm711, %v1349
        %1384 = vst.msk [vmem:[%s409 + $0x10] sm:$0xff] %vm711, %v1354
        %1385 = vst.msk [vmem:[%s409 + $0x18] sm:$0xff] %vm711, %v1359
        %1386 = vst.msk [vmem:[%s409 + $0x20] sm:$0xff] %vm711, %v1364
        %1387 = vst.msk [vmem:[%s409 + $0x28] sm:$0xff] %vm711, %v1369
        %1388 = vst.msk [vmem:[%s409 + $0x30] sm:$0xff] %vm711, %v1374
        %1389 = vst.msk [vmem:[%s409 + $0x38] sm:$0xff] %vm711, %v1379
      $region68: #{tpu_custom_call.1} parent=59 // pred_fallthru
        _
      %s1390 = smul.u32 8, %s25
      %p1391 = scmp.lt.s32.totalorder %s1390, 31
      %s1392 = scalar_select %p1391, %s1390, 31
      %s1393 = smul.addr %s1392, 8
      %s1394 = scalar_lea.vmem %s10, %s1393
      // Predicated region
      $region69: #{tpu_custom_call.1} parent=59 // pred_check
        %p1395 = pneg %p276
      $region70: #{tpu_custom_call.1} parent=59 // pred_check_branch
        %1397 = sbr.rel (%p1395) target = $region72
      $region71: #{tpu_custom_call.1} parent=59 // pred_region
        %s1398 = smul.u32 8, %s25
      $region72: #{tpu_custom_call.1} parent=59 // pred_fallthru
        _
    $region60: #{tpu_custom_call.1} parent=5 // pred_fallthru
      _
    %p1399 = scmp.le.s32.totalorder 2, %s16
    // Predicated region
    $region73: #{tpu_custom_call.1} parent=5 // pred_check
      %p1400 = pneg %p1399
    $region74: #{tpu_custom_call.1} parent=5 // pred_check_branch
      %1402 = sbr.rel (%p1400) target = $region76
    $region75: #{tpu_custom_call.1} parent=5 // pred_region
      %s1403 = ssub.s32 %s16, 2
      // Predicated region
      $region77: #{tpu_custom_call.1} parent=75 // pred_check
        %p1404 = pneg %p282
      $region78: #{tpu_custom_call.1} parent=75 // pred_check_branch
        %1406 = sbr.rel (%p1404) target = $region80
      $region79: #{tpu_custom_call.1} parent=75 // pred_region
        %s1407 = smul.u32 8, %s27
        %p1408 = scmp.lt.s32.totalorder %s1407, 31
        %s1409 = scalar_select %p1408, %s1407, 31
        %s1410 = smul.addr %s1409, 8
        %s1411 = scalar_lea.vmem %s10, %s1410
      $region80: #{tpu_custom_call.1} parent=75 // pred_fallthru
        _
    $region76: #{tpu_custom_call.1} parent=5 // pred_fallthru
      _
  $region6: #{tpu_custom_call.1} parent=0 // loop_footer
    %s20 = sadd.s32 1, %s16
  $region7: #{tpu_custom_call.1} parent=0 // loop_footer_branch
    %15 = sbr.rel target = $region3
  $region8: #{tpu_custom_call.1} parent=0 // loop_exit
    _

</llo_original>
